<compile_context>
chip_gen: v7x
topology: tpu7x:2x2x1
jax: 0.10.0
libtpu: 0.0.40
codegen_flags: <defaults>
</compile_context>

<pallas_src>
import functools

import jax
import jax.numpy as jnp
import numpy as np
from jax import lax
from jax.experimental import pallas as pl
from jax.experimental.pallas import tpu as pltpu

LANE = 128
SUBLANE = 8


def mlp7a_kernel(x_ref, s_ref, pp_ref, w2_ref, w3_ref, o_ref, *,
                 mxu_dtype, precision):
    # x_ref:  (TB, D_pad)      narrow input, features zero-padded to 8 lanes
    # s_ref:  (D_pad, DH)      block-scatter of W1: S[i, i*H+j] = W1[i, j]
    # pp_ref: (3, DH)          rows: [b1_flat, b2 (padded), b3 (padded)]
    # w2_ref: (DH, H)          fc_hidden weight, transposed (+ zero rows if padded)
    # w3_ref: (H, D_out)       fc_output weight, transposed (narrow output)
    # o_ref:  (TB, D_out)
    H = w2_ref.shape[1]
    d_out = w3_ref.shape[1]

    b1 = pp_ref[0:1, :]                       # (1, DH)
    b2 = pp_ref[1:2, :H]                      # (1, H)
    b3 = pp_ref[2:3, :d_out]                  # (1, D_out)

    x = x_ref[...]                            # (TB, D_pad)

    # Per-feature Linear(1, H) + ReLU via the block-scatter matmul:
    # (x @ S)[:, i*H+j] == x[:, i] * W1[i, j]; padded columns stay 0.
    proc = jnp.dot(x.astype(mxu_dtype), s_ref[...].astype(mxu_dtype),
                   preferred_element_type=jnp.float32, precision=precision) + b1
    proc = jnp.maximum(proc, 0.0)             # (TB, DH)

    # fc_hidden + ReLU (single K=DH MXU matmul, f32 accumulation).
    h = jnp.dot(proc.astype(mxu_dtype), w2_ref[...].astype(mxu_dtype),
                preferred_element_type=jnp.float32, precision=precision) + b2
    h = jnp.maximum(h, 0.0)                   # (TB, H)

    # Dropout(0.2) is identity at inference.  fc_output, narrow store.
    out = jnp.dot(h.astype(mxu_dtype), w3_ref[...].astype(mxu_dtype),
                  preferred_element_type=jnp.float32, precision=precision) + b3
    o_ref[...] = out.astype(o_ref.dtype)      # (TB, D_out)


def pack_params(params):
    """Build VMEM-resident kernel operands from PyTorch-layout params."""
    w1, b1, w2, b2, w3, b3 = [jnp.asarray(p, jnp.float32) for p in params]
    d_in, h = w1.shape
    d_out = w3.shape[0]
    dh = d_in * h
    dh_pad = -(-dh // LANE) * LANE            # lane-dense K for the big matmul
    d_pad = -(-d_in // SUBLANE) * SUBLANE     # sublane-aligned feature count

    # Block-scatter matrix: row i holds W1[i] in columns [i*h, (i+1)*h).
    s = jnp.zeros((d_pad, dh_pad), jnp.float32)
    for i in range(d_in):
        s = s.at[i, i * h:(i + 1) * h].set(w1[i])

    b1_row = jnp.zeros((dh_pad,), jnp.float32).at[:dh].set(b1.reshape(-1))
    b2_row = jnp.zeros((dh_pad,), jnp.float32).at[:h].set(b2)
    b3_row = jnp.zeros((dh_pad,), jnp.float32).at[:d_out].set(b3)
    pp = jnp.stack([b1_row, b2_row, b3_row], axis=0)          # (3, DH)

    w2_t = jnp.zeros((dh_pad, h), jnp.float32).at[:dh, :].set(w2.T)  # (DH, H)
    w3_t = w3.T                                                       # (H, D_out)
    return s, pp, w2_t, w3_t, d_in, d_pad, d_out


def _choose_tile(batch, block_b):
    if batch <= SUBLANE:
        return batch                           # too small to split; one step
    # >=2 grid steps (v7x dual-TC sharding + DMA/compute overlap), tile a
    # multiple of 8 sublanes, capped at block_b to stay inside scoped VMEM.
    tb = min(block_b, -(-batch // 2))
    return -(-tb // SUBLANE) * SUBLANE


def mlp7a_forward(x, params, *, block_b=8192, mxu_dtype=jnp.float32):
    s, pp, w2_t, w3_t, d_in, d_pad, d_out = pack_params(params)
    x = jnp.asarray(x, jnp.float32)
    batch = x.shape[0]

    tb = _choose_tile(batch, block_b)
    b_pad = -(-batch // tb) * tb
    # Narrow input: zero-pad features to 8 lanes and batch to the tile size.
    x_pad = jnp.zeros((b_pad, d_pad), jnp.float32).at[:batch, :d_in].set(x)

    precision = (lax.Precision.HIGHEST if mxu_dtype == jnp.float32
                 else lax.Precision.DEFAULT)

    out = pl.pallas_call(
        functools.partial(mlp7a_kernel, mxu_dtype=mxu_dtype,
                          precision=precision),
        out_shape=jax.ShapeDtypeStruct((b_pad, d_out), jnp.float32),
        grid=(b_pad // tb,),
        in_specs=[
            pl.BlockSpec((tb, d_pad), lambda i: (i, 0)),   # x tile (pipelined)
            pl.BlockSpec(s.shape, lambda i: (0, 0)),       # scatter(W1), resident
            pl.BlockSpec(pp.shape, lambda i: (0, 0)),      # packed biases
            pl.BlockSpec(w2_t.shape, lambda i: (0, 0)),    # fc_hidden weight
            pl.BlockSpec(w3_t.shape, lambda i: (0, 0)),    # fc_output weight
        ],
        out_specs=pl.BlockSpec((tb, d_out), lambda i: (i, 0)),  # narrow output
        compiler_params=pltpu.CompilerParams(
            dimension_semantics=("parallel",),             # 2-TC sharding on v7x
            vmem_limit_bytes=32 * 1024 * 1024),            # fits v5e/v6e/v7x scoped VMEM
    )(x_pad, s, pp, w2_t, w3_t)
    return out[:batch]


def mlp7a_reference(x, params):
    """Pure-JAX reference of the PyTorch forward (inference mode)."""
    w1, b1, w2, b2, w3, b3 = params
    B = x.shape[0]
    proc = jnp.maximum(x[:, :, None] * w1[None] + b1[None], 0.0)   # (B, D_in, H)
    x_all = proc.reshape(B, -1)
    h = jnp.maximum(
        jnp.dot(x_all, w2.T, precision=lax.Precision.HIGHEST) + b2, 0.0)
    return jnp.dot(h, w3.T, precision=lax.Precision.HIGHEST) + b3


def make_params(key, input_dim, hidden_dim, output_dim):
    """PyTorch-layout parameters for the layers MLPModel7a uses in forward."""
    ks = jax.random.split(key, 6)
    # fc_input: input_dim copies of Linear(1, hidden_dim), stacked.
    w1 = jax.random.normal(ks[0], (input_dim, hidden_dim), jnp.float32) * 0.1
    b1 = jax.random.normal(ks[1], (input_dim, hidden_dim), jnp.float32) * 0.1
    # fc_hidden: Linear(input_dim*hidden_dim, hidden_dim).
    w2 = jax.random.normal(
        ks[2], (hidden_dim, input_dim * hidden_dim), jnp.float32) * 0.05
    b2 = jax.random.normal(ks[3], (hidden_dim,), jnp.float32) * 0.1
    # fc_output: Linear(hidden_dim, output_dim).
    w3 = jax.random.normal(ks[4], (output_dim, hidden_dim), jnp.float32) * 0.1
    b3 = jax.random.normal(ks[5], (output_dim,), jnp.float32) * 0.1
    return (w1, b1, w2, b2, w3, b3)


if __name__ == "__main__":
    key = jax.random.PRNGKey(0)
    batch, input_dim, hidden_dim, output_dim = 2, 4, 32, 8

    kx, kp = jax.random.split(key)
    # Equivalent of the PyTorch list of input_dim tensors of shape (batch, 1),
    # packed as columns of a (batch, input_dim) matrix.
    x = jax.random.normal(kx, (batch, input_dim), jnp.float32)
    params = make_params(kp, input_dim, hidden_dim, output_dim)

    out = jax.block_until_ready(mlp7a_forward(x, params))
    ref = jax.block_until_ready(mlp7a_reference(x, params))
    np.testing.assert_allclose(np.asarray(out), np.asarray(ref),
                               rtol=1e-5, atol=1e-5)
    # TODO(synk): AttentionLayer / FactorAttentionLayer are constructed by the
    # module but never called in forward(), so they are intentionally omitted.
    print("KERNEL_OK")
</pallas_src>

<mosaic_0001>
module attributes {stable_mosaic.version = 11 : i64} {
  func.func @mlp7a_kernel(%arg0: i32, %arg1: memref<2x8xf32, #tpu.memory_space<vmem>>, %arg2: memref<8x128xf32, #tpu.memory_space<vmem>>, %arg3: memref<3x128xf32, #tpu.memory_space<vmem>>, %arg4: memref<128x32xf32, #tpu.memory_space<vmem>>, %arg5: memref<32x8xf32, #tpu.memory_space<vmem>>, %arg6: memref<2x8xf32, #tpu.memory_space<vmem>>) attributes {dimension_semantics = [#tpu.dimension_semantics<parallel>], iteration_bounds = array<i64: 1>, scalar_prefetch = 0 : i64, scratch_operands = 0 : i64, tpu.core_type = #tpu.core_type<tc>, window_params = [{transform_indices = @transform_0, window_bounds = array<i64: 2, 8>}, {pipeline_mode = #tpu.pipeline_mode<synchronous>, transform_indices = @transform_1, window_bounds = array<i64: 8, 128>}, {pipeline_mode = #tpu.pipeline_mode<synchronous>, transform_indices = @transform_2, window_bounds = array<i64: 3, 128>}, {pipeline_mode = #tpu.pipeline_mode<synchronous>, transform_indices = @transform_3, window_bounds = array<i64: 128, 32>}, {pipeline_mode = #tpu.pipeline_mode<synchronous>, transform_indices = @transform_4, window_bounds = array<i64: 32, 8>}, {transform_indices = @transform_5, window_bounds = array<i64: 2, 8>}]} {
    %c0 = arith.constant 0 : index
    %c0_0 = arith.constant 0 : index
    %0 = vector.load %arg3[%c0, %c0_0] : memref<3x128xf32, #tpu.memory_space<vmem>>, vector<1x128xf32>
    %c1 = arith.constant 1 : index
    %c0_1 = arith.constant 0 : index
    %1 = vector.load %arg3[%c1, %c0_1] : memref<3x128xf32, #tpu.memory_space<vmem>>, vector<1x32xf32>
    %c2 = arith.constant 2 : index
    %c0_2 = arith.constant 0 : index
    %2 = vector.load %arg3[%c2, %c0_2] : memref<3x128xf32, #tpu.memory_space<vmem>>, vector<1x8xf32>
    %c0_3 = arith.constant 0 : index
    %c0_4 = arith.constant 0 : index
    %3 = vector.load %arg1[%c0_3, %c0_4] : memref<2x8xf32, #tpu.memory_space<vmem>>, vector<2x8xf32>
    %c0_5 = arith.constant 0 : index
    %c0_6 = arith.constant 0 : index
    %4 = vector.load %arg2[%c0_5, %c0_6] : memref<8x128xf32, #tpu.memory_space<vmem>>, vector<8x128xf32>
    %cst = arith.constant dense<0.000000e+00> : vector<2x128xf32>
    %5 = tpu.matmul %3, %4, %cst {dimension_numbers = #tpu.dot_dimension_numbers<[1], [0], [0], [1], [0, 0, 1, 1], [], []>, precision = #tpu.contract_precision<fp32>} : vector<2x8xf32>, vector<8x128xf32>, vector<2x128xf32> -> vector<2x128xf32>
    %6 = vector.broadcast %0 : vector<1x128xf32> to vector<2x128xf32>
    %7 = arith.addf %5, %6 : vector<2x128xf32>
    %cst_7 = arith.constant 0.000000e+00 : f32
    %8 = vector.broadcast %cst_7 : f32 to vector<2x128xf32>
    %9 = arith.maximumf %7, %8 : vector<2x128xf32>
    %c0_8 = arith.constant 0 : index
    %c0_9 = arith.constant 0 : index
    %10 = vector.load %arg4[%c0_8, %c0_9] : memref<128x32xf32, #tpu.memory_space<vmem>>, vector<128x32xf32>
    %cst_10 = arith.constant dense<0.000000e+00> : vector<2x32xf32>
    %11 = tpu.matmul %9, %10, %cst_10 {dimension_numbers = #tpu.dot_dimension_numbers<[1], [0], [0], [1], [0, 0, 1, 1], [], []>, precision = #tpu.contract_precision<fp32>} : vector<2x128xf32>, vector<128x32xf32>, vector<2x32xf32> -> vector<2x32xf32>
    %12 = vector.broadcast %1 : vector<1x32xf32> to vector<2x32xf32>
    %13 = arith.addf %11, %12 : vector<2x32xf32>
    %cst_11 = arith.constant 0.000000e+00 : f32
    %14 = vector.broadcast %cst_11 : f32 to vector<2x32xf32>
    %15 = arith.maximumf %13, %14 : vector<2x32xf32>
    %c0_12 = arith.constant 0 : index
    %c0_13 = arith.constant 0 : index
    %16 = vector.load %arg5[%c0_12, %c0_13] : memref<32x8xf32, #tpu.memory_space<vmem>>, vector<32x8xf32>
    %cst_14 = arith.constant dense<0.000000e+00> : vector<2x8xf32>
    %17 = tpu.matmul %15, %16, %cst_14 {dimension_numbers = #tpu.dot_dimension_numbers<[1], [0], [0], [1], [0, 0, 1, 1], [], []>, precision = #tpu.contract_precision<fp32>} : vector<2x32xf32>, vector<32x8xf32>, vector<2x8xf32> -> vector<2x8xf32>
    %18 = vector.broadcast %2 : vector<1x8xf32> to vector<2x8xf32>
    %19 = arith.addf %17, %18 : vector<2x8xf32>
    %c0_15 = arith.constant 0 : index
    %c0_16 = arith.constant 0 : index
    %20 = vector.load %arg6[%c0_15, %c0_16] : memref<2x8xf32, #tpu.memory_space<vmem>>, vector<2x8xf32>
    tpu.vector_store %arg6[%c0_15, %c0_16], %19 {strides = array<i32>} : memref<2x8xf32, #tpu.memory_space<vmem>>, vector<2x8xf32>,
    return
  }
  func.func @transform_0(%arg0: i32) -> (i32, i32) {
    %c0_i32 = arith.constant 0 : i32
    %c0_i32_0 = arith.constant 0 : i32
    return %arg0, %c0_i32 : i32, i32
  }
  func.func @transform_1(%arg0: i32) -> (i32, i32) {
    %c0_i32 = arith.constant 0 : i32
    %c0_i32_0 = arith.constant 0 : i32
    %c0_i32_1 = arith.constant 0 : i32
    return %c0_i32, %c0_i32_0 : i32, i32
  }
  func.func @transform_2(%arg0: i32) -> (i32, i32) {
    %c0_i32 = arith.constant 0 : i32
    %c0_i32_0 = arith.constant 0 : i32
    %c0_i32_1 = arith.constant 0 : i32
    return %c0_i32, %c0_i32_0 : i32, i32
  }
  func.func @transform_3(%arg0: i32) -> (i32, i32) {
    %c0_i32 = arith.constant 0 : i32
    %c0_i32_0 = arith.constant 0 : i32
    %c0_i32_1 = arith.constant 0 : i32
    return %c0_i32, %c0_i32_0 : i32, i32
  }
  func.func @transform_4(%arg0: i32) -> (i32, i32) {
    %c0_i32 = arith.constant 0 : i32
    %c0_i32_0 = arith.constant 0 : i32
    %c0_i32_1 = arith.constant 0 : i32
    return %c0_i32, %c0_i32_0 : i32, i32
  }
  func.func @transform_5(%arg0: i32) -> (i32, i32) {
    %c0_i32 = arith.constant 0 : i32
    %c0_i32_0 = arith.constant 0 : i32
    return %arg0, %c0_i32 : i32, i32
  }
}

</mosaic_0001>

<llo_original>
// kernel: tpu_custom_call.1
$region0: #{tpu_custom_call.1}
  #allocation0 [shape = 'u32[]', space=smem, size = 0x4, offset = 0x4, fixed_abs, tag = 'smem constant byte address 0x4 - core index']
  #allocation1 [shape = 'u32[144,128]{1,0:T(1,128)}', space=vmem, size = 0x12000, scoped, tag = 'internal scratch']
  %s0 = inlined_call_operand.vmem [shape: f32[2,8], index: 0, kind: input, shape index: {}]
  %s1 = inlined_call_operand.vmem [shape: f32[8,128], index: 1, kind: input, shape index: {}]
  %s2 = inlined_call_operand.vmem [shape: f32[3,128], index: 2, kind: input, shape index: {}]
  %s3 = inlined_call_operand.vmem [shape: f32[128,32], index: 3, kind: input, shape index: {}]
  %s4 = inlined_call_operand.vmem [shape: f32[32,8], index: 4, kind: input, shape index: {}]
  %s5 = inlined_call_operand.hbm [shape: f32[2,8], index: 5, kind: output, shape index: {}]
  %s6 = sld [smem:[#allocation0]]
  $region30: #{tpu_custom_call.1} parent=0
    _
  %s8 = ssub.s32 1, %s6
  %s9 = scalar_select 0, %s8, %s6
  $region1: #{tpu_custom_call.1} parent=0
    #allocation2 [shape = 'u8[1024]{0}', space=vmem, size = 0x400, scoped, tag = 'output window, operand 0, single buffered']
    #allocation3 [shape = 's32[1]{0}', space=sflag, size = 0x4, scoped, tag = 'scoped memory for tpu_custom_call.1']
    %10 = vsyncpa [#allocation3], 0
    // Predicated region
    $region2: #{tpu_custom_call.1} parent=1 // pred_check
      _
    $region3: #{tpu_custom_call.1} parent=1 // pred_check_branch
      %12 = sbr.rel (0) target = $region5
    $region4: #{tpu_custom_call.1} parent=1 // pred_region
      _
    $region5: #{tpu_custom_call.1} parent=1 // pred_fallthru
      _
    // Predicated region
    $region6: #{tpu_custom_call.1} parent=1 // pred_check
      _
    $region7: #{tpu_custom_call.1} parent=1 // pred_check_branch
      %14 = sbr.rel (0) target = $region9
    $region8: #{tpu_custom_call.1} parent=1 // pred_region
      _
    $region9: #{tpu_custom_call.1} parent=1 // pred_fallthru
      _
    // Predicated region
    $region10: #{tpu_custom_call.1} parent=1 // pred_check
      _
    $region11: #{tpu_custom_call.1} parent=1 // pred_check_branch
      %16 = sbr.rel (0) target = $region13
    $region12: #{tpu_custom_call.1} parent=1 // pred_region
      _
    $region13: #{tpu_custom_call.1} parent=1 // pred_fallthru
      _
    // Predicated region
    $region14: #{tpu_custom_call.1} parent=1 // pred_check
      _
    $region15: #{tpu_custom_call.1} parent=1 // pred_check_branch
      %18 = sbr.rel (0) target = $region17
    $region16: #{tpu_custom_call.1} parent=1 // pred_region
      _
    $region17: #{tpu_custom_call.1} parent=1 // pred_fallthru
      _
    // Predicated region
    $region18: #{tpu_custom_call.1} parent=1 // pred_check
      _
    $region19: #{tpu_custom_call.1} parent=1 // pred_check_branch
      %20 = sbr.rel (0) target = $region21
    $region20: #{tpu_custom_call.1} parent=1 // pred_region
      _
    $region21: #{tpu_custom_call.1} parent=1 // pred_fallthru
      _
    %v21 = vld [vmem:[%s2] sm:$0x1]
    %v22 = vld [vmem:[%s2 + $0x1] sm:$0x1]
    %v23 = vld [vmem:[%s2 + $0x2] sm:$0x1]
    %v24 = vld [vmem:[%s0] sm:$0x3]
    %v25 = vld [vmem:[%s1] sm:$0xff]
    %v26 = vlaneseq
    %v27 = vshrl.u32 %v26, 7
    %v28 = vsub.s32 0, %v27
    %v29 = vrot.slane %v21, %v28
    %vm30 = vcmask 64512
    %v32 = vsel %vm30, %v24, 0
    %34 = vmatprep.subr.mxu0 0.0
    %v35 = vand.u32 %v25, 4294901760
    %36 = vmatpush1.msra.mxu0 %v35
    %37 = vmatprep.subr.mxu0 0.0
    %38 = vmatpush1.msra.mxu0 0.0
    %39 = vmatprep.subr.mxu0 0.0
    %40 = vmatpush1.msra.mxu0 0.0
    %41 = vmatprep.subr.mxu0 0.0
    %42 = vmatpush1.msra.mxu0 0.0
    %43 = vmatprep.subr.mxu0 0.0
    %44 = vmatpush1.msra.mxu0 0.0
    %45 = vmatprep.subr.mxu0 0.0
    %46 = vmatpush1.msra.mxu0 0.0
    %47 = vmatprep.subr.mxu0 0.0
    %48 = vmatpush1.msra.mxu0 0.0
    %49 = vmatprep.subr.mxu0 0.0
    %50 = vmatpush1.msra.mxu0 0.0
    %51 = vmatprep.subr.mxu0 0.0
    %52 = vmatpush1.msra.mxu0 0.0
    %53 = vmatprep.subr.mxu0 0.0
    %54 = vmatpush1.msra.mxu0 0.0
    %55 = vmatprep.subr.mxu0 0.0
    %56 = vmatpush1.msra.mxu0 0.0
    %57 = vmatprep.subr.mxu0 0.0
    %58 = vmatpush1.msra.mxu0 0.0
    %59 = vmatprep.subr.mxu0 0.0
    %60 = vmatpush1.msra.mxu0 0.0
    %61 = vmatprep.subr.mxu0 0.0
    %62 = vmatpush1.msra.mxu0 0.0
    %63 = vmatprep.subr.mxu0 0.0
    %64 = vmatpush1.msra.mxu0 0.0
    %65 = vmatprep.subr.mxu0 0.0
    %66 = vmatpush1.msra.mxu0 0.0
    %67 = vmatprep.subr.mxu0 0.0
    %68 = vmatpush1.msra.mxu0 0.0
    %69 = vmatprep.subr.mxu0 0.0
    %70 = vmatpush1.msra.mxu0 0.0
    %71 = vmatprep.subr.mxu0 0.0
    %72 = vmatpush1.msra.mxu0 0.0
    %73 = vmatprep.subr.mxu0 0.0
    %74 = vmatpush1.msra.mxu0 0.0
    %75 = vmatprep.subr.mxu0 0.0
    %76 = vmatpush1.msra.mxu0 0.0
    %77 = vmatprep.subr.mxu0 0.0
    %78 = vmatpush1.msra.mxu0 0.0
    %79 = vmatprep.subr.mxu0 0.0
    %80 = vmatpush1.msra.mxu0 0.0
    %81 = vmatprep.subr.mxu0 0.0
    %82 = vmatpush1.msra.mxu0 0.0
    %83 = vmatprep.subr.mxu0 0.0
    %84 = vmatpush1.msra.mxu0 0.0
    %85 = vmatprep.subr.mxu0 0.0
    %86 = vmatpush1.msra.mxu0 0.0
    %87 = vmatprep.subr.mxu0 0.0
    %88 = vmatpush1.msra.mxu0 0.0
    %89 = vmatprep.subr.mxu0 0.0
    %90 = vmatpush1.msra.mxu0 0.0
    %91 = vmatprep.subr.mxu0 0.0
    %92 = vmatpush1.msra.mxu0 0.0
    %93 = vmatprep.subr.mxu0 0.0
    %94 = vmatpush1.msra.mxu0 0.0
    %95 = vmatprep.subr.mxu0 0.0
    %96 = vmatpush1.msra.mxu0 0.0
    %97 = vmatprep.subr.mxu0 0.0
    %98 = vmatpush1.msra.mxu0 0.0
    %99 = vmatprep.mubr.f32.mxu0 0.0
    %v100 = vand.u32 %v32, 4294901760
    %v101 = vsub.f32 %v32, %v100
    %v102 = vand.u32 %v101, 4294901760
    %v103 = vsub.f32 %v101, %v102
    %v104 = vand.u32 %v103, 4294901760
    %105 = vmatmul.mubr.f32.gmra.mrb[0].mxu0 %v104
    %v106 = vpop.f32.mrb[0].mxu0
    %v107 = vadd.f32 %v29, %v106
    %v108 = vpop.f32.mrb[0].mxu0
    %109 = vdwg.mxu0
    %110 = vmatprep.subr.mxu0 0.0
    %v111 = vand.u32 %v25, 4294901760
    %v112 = vsub.f32 %v25, %v111
    %v113 = vand.u32 %v112, 4294901760
    %v114 = vsub.f32 %v112, %v113
    %v115 = vand.u32 %v114, 4294901760
    %116 = vmatpush1.msra.mxu0 %v115
    %117 = vmatprep.subr.mxu0 0.0
    %118 = vmatpush1.msra.mxu0 0.0
    %119 = vmatprep.subr.mxu0 0.0
    %120 = vmatpush1.msra.mxu0 0.0
    %121 = vmatprep.subr.mxu0 0.0
    %122 = vmatpush1.msra.mxu0 0.0
    %123 = vmatprep.subr.mxu0 0.0
    %124 = vmatpush1.msra.mxu0 0.0
    %125 = vmatprep.subr.mxu0 0.0
    %126 = vmatpush1.msra.mxu0 0.0
    %127 = vmatprep.subr.mxu0 0.0
    %128 = vmatpush1.msra.mxu0 0.0
    %129 = vmatprep.subr.mxu0 0.0
    %130 = vmatpush1.msra.mxu0 0.0
    %131 = vmatprep.subr.mxu0 0.0
    %132 = vmatpush1.msra.mxu0 0.0
    %133 = vmatprep.subr.mxu0 0.0
    %134 = vmatpush1.msra.mxu0 0.0
    %135 = vmatprep.subr.mxu0 0.0
    %136 = vmatpush1.msra.mxu0 0.0
    %137 = vmatprep.subr.mxu0 0.0
    %138 = vmatpush1.msra.mxu0 0.0
    %139 = vmatprep.subr.mxu0 0.0
    %140 = vmatpush1.msra.mxu0 0.0
    %141 = vmatprep.subr.mxu0 0.0
    %142 = vmatpush1.msra.mxu0 0.0
    %143 = vmatprep.subr.mxu0 0.0
    %144 = vmatpush1.msra.mxu0 0.0
    %145 = vmatprep.subr.mxu0 0.0
    %146 = vmatpush1.msra.mxu0 0.0
    %147 = vmatprep.subr.mxu0 0.0
    %148 = vmatpush1.msra.mxu0 0.0
    %149 = vmatprep.subr.mxu0 0.0
    %150 = vmatpush1.msra.mxu0 0.0
    %151 = vmatprep.subr.mxu0 0.0
    %152 = vmatpush1.msra.mxu0 0.0
    %153 = vmatprep.subr.mxu0 0.0
    %154 = vmatpush1.msra.mxu0 0.0
    %155 = vmatprep.subr.mxu0 0.0
    %156 = vmatpush1.msra.mxu0 0.0
    %157 = vmatprep.subr.mxu0 0.0
    %158 = vmatpush1.msra.mxu0 0.0
    %159 = vmatprep.subr.mxu0 0.0
    %160 = vmatpush1.msra.mxu0 0.0
    %161 = vmatprep.subr.mxu0 0.0
    %162 = vmatpush1.msra.mxu0 0.0
    %163 = vmatprep.subr.mxu0 0.0
    %164 = vmatpush1.msra.mxu0 0.0
    %165 = vmatprep.subr.mxu0 0.0
    %166 = vmatpush1.msra.mxu0 0.0
    %167 = vmatprep.subr.mxu0 0.0
    %168 = vmatpush1.msra.mxu0 0.0
    %169 = vmatprep.subr.mxu0 0.0
    %170 = vmatpush1.msra.mxu0 0.0
    %171 = vmatprep.subr.mxu0 0.0
    %172 = vmatpush1.msra.mxu0 0.0
    %173 = vmatprep.subr.mxu0 0.0
    %174 = vmatpush1.msra.mxu0 0.0
    %175 = vmatprep.subr.mxu0 0.0
    %176 = vmatpush1.msra.mxu0 0.0
    %177 = vmatprep.subr.mxu0 0.0
    %178 = vmatpush1.msra.mxu0 0.0
    %179 = vmatprep.mubr.f32.mxu0 0.0
    %v180 = vand.u32 %v32, 4294901760
    %181 = vmatmul.mubr.f32.gmra.mrb[0].mxu0 %v180
    %v182 = vpop.f32.mrb[0].mxu0
    %v183 = vadd.f32 %v107, %v182
    %v184 = vpop.f32.mrb[0].mxu0
    %185 = vdwg.mxu0
    %186 = vmatprep.subr.mxu0 0.0
    %v187 = vand.u32 %v25, 4294901760
    %v188 = vsub.f32 %v25, %v187
    %189 = vmatpush1.msra.mxu0 %v188
    %190 = vmatprep.subr.mxu0 0.0
    %191 = vmatpush1.msra.mxu0 0.0
    %192 = vmatprep.subr.mxu0 0.0
    %193 = vmatpush1.msra.mxu0 0.0
    %194 = vmatprep.subr.mxu0 0.0
    %195 = vmatpush1.msra.mxu0 0.0
    %196 = vmatprep.subr.mxu0 0.0
    %197 = vmatpush1.msra.mxu0 0.0
    %198 = vmatprep.subr.mxu0 0.0
    %199 = vmatpush1.msra.mxu0 0.0
    %200 = vmatprep.subr.mxu0 0.0
    %201 = vmatpush1.msra.mxu0 0.0
    %202 = vmatprep.subr.mxu0 0.0
    %203 = vmatpush1.msra.mxu0 0.0
    %204 = vmatprep.subr.mxu0 0.0
    %205 = vmatpush1.msra.mxu0 0.0
    %206 = vmatprep.subr.mxu0 0.0
    %207 = vmatpush1.msra.mxu0 0.0
    %208 = vmatprep.subr.mxu0 0.0
    %209 = vmatpush1.msra.mxu0 0.0
    %210 = vmatprep.subr.mxu0 0.0
    %211 = vmatpush1.msra.mxu0 0.0
    %212 = vmatprep.subr.mxu0 0.0
    %213 = vmatpush1.msra.mxu0 0.0
    %214 = vmatprep.subr.mxu0 0.0
    %215 = vmatpush1.msra.mxu0 0.0
    %216 = vmatprep.subr.mxu0 0.0
    %217 = vmatpush1.msra.mxu0 0.0
    %218 = vmatprep.subr.mxu0 0.0
    %219 = vmatpush1.msra.mxu0 0.0
    %220 = vmatprep.subr.mxu0 0.0
    %221 = vmatpush1.msra.mxu0 0.0
    %222 = vmatprep.subr.mxu0 0.0
    %223 = vmatpush1.msra.mxu0 0.0
    %224 = vmatprep.subr.mxu0 0.0
    %225 = vmatpush1.msra.mxu0 0.0
    %226 = vmatprep.subr.mxu0 0.0
    %227 = vmatpush1.msra.mxu0 0.0
    %228 = vmatprep.subr.mxu0 0.0
    %229 = vmatpush1.msra.mxu0 0.0
    %230 = vmatprep.subr.mxu0 0.0
    %231 = vmatpush1.msra.mxu0 0.0
    %232 = vmatprep.subr.mxu0 0.0
    %233 = vmatpush1.msra.mxu0 0.0
    %234 = vmatprep.subr.mxu0 0.0
    %235 = vmatpush1.msra.mxu0 0.0
    %236 = vmatprep.subr.mxu0 0.0
    %237 = vmatpush1.msra.mxu0 0.0
    %238 = vmatprep.subr.mxu0 0.0
    %239 = vmatpush1.msra.mxu0 0.0
    %240 = vmatprep.subr.mxu0 0.0
    %241 = vmatpush1.msra.mxu0 0.0
    %242 = vmatprep.subr.mxu0 0.0
    %243 = vmatpush1.msra.mxu0 0.0
    %244 = vmatprep.subr.mxu0 0.0
    %245 = vmatpush1.msra.mxu0 0.0
    %246 = vmatprep.subr.mxu0 0.0
    %247 = vmatpush1.msra.mxu0 0.0
    %248 = vmatprep.subr.mxu0 0.0
    %249 = vmatpush1.msra.mxu0 0.0
    %250 = vmatprep.subr.mxu0 0.0
    %251 = vmatpush1.msra.mxu0 0.0
    %252 = vmatprep.mubr.f32.mxu0 0.0
    %v253 = vand.u32 %v32, 4294901760
    %v254 = vsub.f32 %v32, %v253
    %255 = vmatmul.mubr.f32.gmra.mrb[0].mxu0 %v254
    %v256 = vpop.f32.mrb[0].mxu0
    %v257 = vadd.f32 %v183, %v256
    %v258 = vpop.f32.mrb[0].mxu0
    %259 = vdwg.mxu0
    %260 = vmatprep.subr.mxu0 0.0
    %v261 = vand.u32 %v25, 4294901760
    %262 = vmatpush1.msra.mxu0 %v261
    %263 = vmatprep.subr.mxu0 0.0
    %264 = vmatpush1.msra.mxu0 0.0
    %265 = vmatprep.subr.mxu0 0.0
    %266 = vmatpush1.msra.mxu0 0.0
    %267 = vmatprep.subr.mxu0 0.0
    %268 = vmatpush1.msra.mxu0 0.0
    %269 = vmatprep.subr.mxu0 0.0
    %270 = vmatpush1.msra.mxu0 0.0
    %271 = vmatprep.subr.mxu0 0.0
    %272 = vmatpush1.msra.mxu0 0.0
    %273 = vmatprep.subr.mxu0 0.0
    %274 = vmatpush1.msra.mxu0 0.0
    %275 = vmatprep.subr.mxu0 0.0
    %276 = vmatpush1.msra.mxu0 0.0
    %277 = vmatprep.subr.mxu0 0.0
    %278 = vmatpush1.msra.mxu0 0.0
    %279 = vmatprep.subr.mxu0 0.0
    %280 = vmatpush1.msra.mxu0 0.0
    %281 = vmatprep.subr.mxu0 0.0
    %282 = vmatpush1.msra.mxu0 0.0
    %283 = vmatprep.subr.mxu0 0.0
    %284 = vmatpush1.msra.mxu0 0.0
    %285 = vmatprep.subr.mxu0 0.0
    %286 = vmatpush1.msra.mxu0 0.0
    %287 = vmatprep.subr.mxu0 0.0
    %288 = vmatpush1.msra.mxu0 0.0
    %289 = vmatprep.subr.mxu0 0.0
    %290 = vmatpush1.msra.mxu0 0.0
    %291 = vmatprep.subr.mxu0 0.0
    %292 = vmatpush1.msra.mxu0 0.0
    %293 = vmatprep.subr.mxu0 0.0
    %294 = vmatpush1.msra.mxu0 0.0
    %295 = vmatprep.subr.mxu0 0.0
    %296 = vmatpush1.msra.mxu0 0.0
    %297 = vmatprep.subr.mxu0 0.0
    %298 = vmatpush1.msra.mxu0 0.0
    %299 = vmatprep.subr.mxu0 0.0
    %300 = vmatpush1.msra.mxu0 0.0
    %301 = vmatprep.subr.mxu0 0.0
    %302 = vmatpush1.msra.mxu0 0.0
    %303 = vmatprep.subr.mxu0 0.0
    %304 = vmatpush1.msra.mxu0 0.0
    %305 = vmatprep.subr.mxu0 0.0
    %306 = vmatpush1.msra.mxu0 0.0
    %307 = vmatprep.subr.mxu0 0.0
    %308 = vmatpush1.msra.mxu0 0.0
    %309 = vmatprep.subr.mxu0 0.0
    %310 = vmatpush1.msra.mxu0 0.0
    %311 = vmatprep.subr.mxu0 0.0
    %312 = vmatpush1.msra.mxu0 0.0
    %313 = vmatprep.subr.mxu0 0.0
    %314 = vmatpush1.msra.mxu0 0.0
    %315 = vmatprep.subr.mxu0 0.0
    %316 = vmatpush1.msra.mxu0 0.0
    %317 = vmatprep.subr.mxu0 0.0
    %318 = vmatpush1.msra.mxu0 0.0
    %319 = vmatprep.subr.mxu0 0.0
    %320 = vmatpush1.msra.mxu0 0.0
    %321 = vmatprep.subr.mxu0 0.0
    %322 = vmatpush1.msra.mxu0 0.0
    %323 = vmatprep.subr.mxu0 0.0
    %324 = vmatpush1.msra.mxu0 0.0
    %325 = vmatprep.mubr.f32.mxu0 0.0
    %v326 = vand.u32 %v32, 4294901760
    %v327 = vsub.f32 %v32, %v326
    %v328 = vand.u32 %v327, 4294901760
    %329 = vmatmul.mubr.f32.gmra.mrb[0].mxu0 %v328
    %v330 = vpop.f32.mrb[0].mxu0
    %v331 = vadd.f32 %v257, %v330
    %v332 = vpop.f32.mrb[0].mxu0
    %333 = vdwg.mxu0
    %334 = vmatprep.subr.mxu0 0.0
    %v335 = vand.u32 %v25, 4294901760
    %v336 = vsub.f32 %v25, %v335
    %v337 = vand.u32 %v336, 4294901760
    %338 = vmatpush1.msra.mxu0 %v337
    %339 = vmatprep.subr.mxu0 0.0
    %340 = vmatpush1.msra.mxu0 0.0
    %341 = vmatprep.subr.mxu0 0.0
    %342 = vmatpush1.msra.mxu0 0.0
    %343 = vmatprep.subr.mxu0 0.0
    %344 = vmatpush1.msra.mxu0 0.0
    %345 = vmatprep.subr.mxu0 0.0
    %346 = vmatpush1.msra.mxu0 0.0
    %347 = vmatprep.subr.mxu0 0.0
    %348 = vmatpush1.msra.mxu0 0.0
    %349 = vmatprep.subr.mxu0 0.0
    %350 = vmatpush1.msra.mxu0 0.0
    %351 = vmatprep.subr.mxu0 0.0
    %352 = vmatpush1.msra.mxu0 0.0
    %353 = vmatprep.subr.mxu0 0.0
    %354 = vmatpush1.msra.mxu0 0.0
    %355 = vmatprep.subr.mxu0 0.0
    %356 = vmatpush1.msra.mxu0 0.0
    %357 = vmatprep.subr.mxu0 0.0
    %358 = vmatpush1.msra.mxu0 0.0
    %359 = vmatprep.subr.mxu0 0.0
    %360 = vmatpush1.msra.mxu0 0.0
    %361 = vmatprep.subr.mxu0 0.0
    %362 = vmatpush1.msra.mxu0 0.0
    %363 = vmatprep.subr.mxu0 0.0
    %364 = vmatpush1.msra.mxu0 0.0
    %365 = vmatprep.subr.mxu0 0.0
    %366 = vmatpush1.msra.mxu0 0.0
    %367 = vmatprep.subr.mxu0 0.0
    %368 = vmatpush1.msra.mxu0 0.0
    %369 = vmatprep.subr.mxu0 0.0
    %370 = vmatpush1.msra.mxu0 0.0
    %371 = vmatprep.subr.mxu0 0.0
    %372 = vmatpush1.msra.mxu0 0.0
    %373 = vmatprep.subr.mxu0 0.0
    %374 = vmatpush1.msra.mxu0 0.0
    %375 = vmatprep.subr.mxu0 0.0
    %376 = vmatpush1.msra.mxu0 0.0
    %377 = vmatprep.subr.mxu0 0.0
    %378 = vmatpush1.msra.mxu0 0.0
    %379 = vmatprep.subr.mxu0 0.0
    %380 = vmatpush1.msra.mxu0 0.0
    %381 = vmatprep.subr.mxu0 0.0
    %382 = vmatpush1.msra.mxu0 0.0
    %383 = vmatprep.subr.mxu0 0.0
    %384 = vmatpush1.msra.mxu0 0.0
    %385 = vmatprep.subr.mxu0 0.0
    %386 = vmatpush1.msra.mxu0 0.0
    %387 = vmatprep.subr.mxu0 0.0
    %388 = vmatpush1.msra.mxu0 0.0
    %389 = vmatprep.subr.mxu0 0.0
    %390 = vmatpush1.msra.mxu0 0.0
    %391 = vmatprep.subr.mxu0 0.0
    %392 = vmatpush1.msra.mxu0 0.0
    %393 = vmatprep.subr.mxu0 0.0
    %394 = vmatpush1.msra.mxu0 0.0
    %395 = vmatprep.subr.mxu0 0.0
    %396 = vmatpush1.msra.mxu0 0.0
    %397 = vmatprep.subr.mxu0 0.0
    %398 = vmatpush1.msra.mxu0 0.0
    %399 = vmatprep.subr.mxu0 0.0
    %400 = vmatpush1.msra.mxu0 0.0
    %401 = vmatprep.mubr.f32.mxu0 0.0
    %v402 = vand.u32 %v32, 4294901760
    %403 = vmatmul.mubr.f32.gmra.mrb[0].mxu0 %v402
    %v404 = vpop.f32.mrb[0].mxu0
    %v405 = vadd.f32 %v331, %v404
    %v406 = vpop.f32.mrb[0].mxu0
    %407 = vdwg.mxu0
    %408 = vmatprep.subr.mxu0 0.0
    %v409 = vand.u32 %v25, 4294901760
    %410 = vmatpush1.msra.mxu0 %v409
    %411 = vmatprep.subr.mxu0 0.0
    %412 = vmatpush1.msra.mxu0 0.0
    %413 = vmatprep.subr.mxu0 0.0
    %414 = vmatpush1.msra.mxu0 0.0
    %415 = vmatprep.subr.mxu0 0.0
    %416 = vmatpush1.msra.mxu0 0.0
    %417 = vmatprep.subr.mxu0 0.0
    %418 = vmatpush1.msra.mxu0 0.0
    %419 = vmatprep.subr.mxu0 0.0
    %420 = vmatpush1.msra.mxu0 0.0
    %421 = vmatprep.subr.mxu0 0.0
    %422 = vmatpush1.msra.mxu0 0.0
    %423 = vmatprep.subr.mxu0 0.0
    %424 = vmatpush1.msra.mxu0 0.0
    %425 = vmatprep.subr.mxu0 0.0
    %426 = vmatpush1.msra.mxu0 0.0
    %427 = vmatprep.subr.mxu0 0.0
    %428 = vmatpush1.msra.mxu0 0.0
    %429 = vmatprep.subr.mxu0 0.0
    %430 = vmatpush1.msra.mxu0 0.0
    %431 = vmatprep.subr.mxu0 0.0
    %432 = vmatpush1.msra.mxu0 0.0
    %433 = vmatprep.subr.mxu0 0.0
    %434 = vmatpush1.msra.mxu0 0.0
    %435 = vmatprep.subr.mxu0 0.0
    %436 = vmatpush1.msra.mxu0 0.0
    %437 = vmatprep.subr.mxu0 0.0
    %438 = vmatpush1.msra.mxu0 0.0
    %439 = vmatprep.subr.mxu0 0.0
    %440 = vmatpush1.msra.mxu0 0.0
    %441 = vmatprep.subr.mxu0 0.0
    %442 = vmatpush1.msra.mxu0 0.0
    %443 = vmatprep.subr.mxu0 0.0
    %444 = vmatpush1.msra.mxu0 0.0
    %445 = vmatprep.subr.mxu0 0.0
    %446 = vmatpush1.msra.mxu0 0.0
    %447 = vmatprep.subr.mxu0 0.0
    %448 = vmatpush1.msra.mxu0 0.0
    %449 = vmatprep.subr.mxu0 0.0
    %450 = vmatpush1.msra.mxu0 0.0
    %451 = vmatprep.subr.mxu0 0.0
    %452 = vmatpush1.msra.mxu0 0.0
    %453 = vmatprep.subr.mxu0 0.0
    %454 = vmatpush1.msra.mxu0 0.0
    %455 = vmatprep.subr.mxu0 0.0
    %456 = vmatpush1.msra.mxu0 0.0
    %457 = vmatprep.subr.mxu0 0.0
    %458 = vmatpush1.msra.mxu0 0.0
    %459 = vmatprep.subr.mxu0 0.0
    %460 = vmatpush1.msra.mxu0 0.0
    %461 = vmatprep.subr.mxu0 0.0
    %462 = vmatpush1.msra.mxu0 0.0
    %463 = vmatprep.subr.mxu0 0.0
    %464 = vmatpush1.msra.mxu0 0.0
    %465 = vmatprep.subr.mxu0 0.0
    %466 = vmatpush1.msra.mxu0 0.0
    %467 = vmatprep.subr.mxu0 0.0
    %468 = vmatpush1.msra.mxu0 0.0
    %469 = vmatprep.subr.mxu0 0.0
    %470 = vmatpush1.msra.mxu0 0.0
    %471 = vmatprep.subr.mxu0 0.0
    %472 = vmatpush1.msra.mxu0 0.0
    %473 = vmatprep.mubr.f32.mxu0 0.0
    %v474 = vand.u32 %v32, 4294901760
    %475 = vmatmul.mubr.f32.gmra.mrb[0].mxu0 %v474
    %v476 = vpop.f32.mrb[0].mxu0
    %v477 = vadd.f32 %v405, %v476
    %v478 = vpop.f32.mrb[0].mxu0
    %479 = vdwg.mxu0
    %v480 = vmax.f32 %v477, 0.0
    %v481 = vld [vmem:[%s3] sm:$0xff]
    %v482 = vld [vmem:[%s3 + $0x8] sm:$0xff]
    %v483 = vld [vmem:[%s3 + $0x10] sm:$0xff]
    %v484 = vld [vmem:[%s3 + $0x18] sm:$0xff]
    %v485 = vld [vmem:[%s3 + $0x20] sm:$0xff]
    %v486 = vld [vmem:[%s3 + $0x28] sm:$0xff]
    %v487 = vld [vmem:[%s3 + $0x30] sm:$0xff]
    %v488 = vld [vmem:[%s3 + $0x38] sm:$0xff]
    %v489 = vld [vmem:[%s3 + $0x40] sm:$0xff]
    %v490 = vld [vmem:[%s3 + $0x48] sm:$0xff]
    %v491 = vld [vmem:[%s3 + $0x50] sm:$0xff]
    %v492 = vld [vmem:[%s3 + $0x58] sm:$0xff]
    %v493 = vld [vmem:[%s3 + $0x60] sm:$0xff]
    %v494 = vld [vmem:[%s3 + $0x68] sm:$0xff]
    %v495 = vld [vmem:[%s3 + $0x70] sm:$0xff]
    %v496 = vld [vmem:[%s3 + $0x78] sm:$0xff]
    %v497 = vlaneseq
    %v498 = vshrl.u32 %v497, 7
    %v499 = vsub.s32 0, %v498
    %v500 = vrot.slane %v22, %v499
    %501 = vmatprep.subr.mxu0 0.0
    %v502 = vand.u32 %v481, 4294901760
    %503 = vmatpush1.msra.mxu0 %v502
    %504 = vmatprep.subr.mxu0 0.0
    %v505 = vand.u32 %v482, 4294901760
    %506 = vmatpush1.msra.mxu0 %v505
    %507 = vmatprep.subr.mxu0 0.0
    %v508 = vand.u32 %v483, 4294901760
    %509 = vmatpush1.msra.mxu0 %v508
    %510 = vmatprep.subr.mxu0 0.0
    %v511 = vand.u32 %v484, 4294901760
    %512 = vmatpush1.msra.mxu0 %v511
    %513 = vmatprep.subr.mxu0 0.0
    %v514 = vand.u32 %v485, 4294901760
    %515 = vmatpush1.msra.mxu0 %v514
    %516 = vmatprep.subr.mxu0 0.0
    %v517 = vand.u32 %v486, 4294901760
    %518 = vmatpush1.msra.mxu0 %v517
    %519 = vmatprep.subr.mxu0 0.0
    %v520 = vand.u32 %v487, 4294901760
    %521 = vmatpush1.msra.mxu0 %v520
    %522 = vmatprep.subr.mxu0 0.0
    %v523 = vand.u32 %v488, 4294901760
    %524 = vmatpush1.msra.mxu0 %v523
    %525 = vmatprep.subr.mxu0 0.0
    %v526 = vand.u32 %v489, 4294901760
    %527 = vmatpush1.msra.mxu0 %v526
    %528 = vmatprep.subr.mxu0 0.0
    %v529 = vand.u32 %v490, 4294901760
    %530 = vmatpush1.msra.mxu0 %v529
    %531 = vmatprep.subr.mxu0 0.0
    %v532 = vand.u32 %v491, 4294901760
    %533 = vmatpush1.msra.mxu0 %v532
    %534 = vmatprep.subr.mxu0 0.0
    %v535 = vand.u32 %v492, 4294901760
    %536 = vmatpush1.msra.mxu0 %v535
    %537 = vmatprep.subr.mxu0 0.0
    %v538 = vand.u32 %v493, 4294901760
    %539 = vmatpush1.msra.mxu0 %v538
    %540 = vmatprep.subr.mxu0 0.0
    %v541 = vand.u32 %v494, 4294901760
    %542 = vmatpush1.msra.mxu0 %v541
    %543 = vmatprep.subr.mxu0 0.0
    %v544 = vand.u32 %v495, 4294901760
    %545 = vmatpush1.msra.mxu0 %v544
    %546 = vmatprep.subr.mxu0 0.0
    %v547 = vand.u32 %v496, 4294901760
    %548 = vmatpush1.msra.mxu0 %v547
    %549 = vmatprep.subr.mxu0 0.0
    %550 = vmatpush1.msra.mxu0 0.0
    %551 = vmatprep.subr.mxu0 0.0
    %552 = vmatpush1.msra.mxu0 0.0
    %553 = vmatprep.subr.mxu0 0.0
    %554 = vmatpush1.msra.mxu0 0.0
    %555 = vmatprep.subr.mxu0 0.0
    %556 = vmatpush1.msra.mxu0 0.0
    %557 = vmatprep.subr.mxu0 0.0
    %558 = vmatpush1.msra.mxu0 0.0
    %559 = vmatprep.subr.mxu0 0.0
    %560 = vmatpush1.msra.mxu0 0.0
    %561 = vmatprep.subr.mxu0 0.0
    %562 = vmatpush1.msra.mxu0 0.0
    %563 = vmatprep.subr.mxu0 0.0
    %564 = vmatpush1.msra.mxu0 0.0
    %565 = vmatprep.subr.mxu0 0.0
    %566 = vmatpush1.msra.mxu0 0.0
    %567 = vmatprep.subr.mxu0 0.0
    %568 = vmatpush1.msra.mxu0 0.0
    %569 = vmatprep.subr.mxu0 0.0
    %570 = vmatpush1.msra.mxu0 0.0
    %571 = vmatprep.subr.mxu0 0.0
    %572 = vmatpush1.msra.mxu0 0.0
    %573 = vmatprep.subr.mxu0 0.0
    %574 = vmatpush1.msra.mxu0 0.0
    %575 = vmatprep.subr.mxu0 0.0
    %576 = vmatpush1.msra.mxu0 0.0
    %577 = vmatprep.subr.mxu0 0.0
    %578 = vmatpush1.msra.mxu0 0.0
    %579 = vmatprep.subr.mxu0 0.0
    %580 = vmatpush1.msra.mxu0 0.0
    %581 = vmatprep.mubr.f32.mxu0 0.0
    %v582 = vand.u32 %v480, 4294901760
    %v583 = vsub.f32 %v480, %v582
    %v584 = vand.u32 %v583, 4294901760
    %v585 = vsub.f32 %v583, %v584
    %v586 = vand.u32 %v585, 4294901760
    %587 = vmatmul.mubr.f32.gmra.mrb[0].mxu0 %v586
    %v588 = vpop.f32.mrb[0].mxu0
    %v589 = vadd.f32 %v500, %v588
    %v590 = vpop.f32.mrb[0].mxu0
    %591 = vdwg.mxu0
    %592 = vmatprep.subr.mxu0 0.0
    %v593 = vand.u32 %v481, 4294901760
    %v594 = vsub.f32 %v481, %v593
    %v595 = vand.u32 %v594, 4294901760
    %v596 = vsub.f32 %v594, %v595
    %v597 = vand.u32 %v596, 4294901760
    %598 = vmatpush1.msra.mxu0 %v597
    %599 = vmatprep.subr.mxu0 0.0
    %v600 = vand.u32 %v482, 4294901760
    %v601 = vsub.f32 %v482, %v600
    %v602 = vand.u32 %v601, 4294901760
    %v603 = vsub.f32 %v601, %v602
    %v604 = vand.u32 %v603, 4294901760
    %605 = vmatpush1.msra.mxu0 %v604
    %606 = vmatprep.subr.mxu0 0.0
    %v607 = vand.u32 %v483, 4294901760
    %v608 = vsub.f32 %v483, %v607
    %v609 = vand.u32 %v608, 4294901760
    %v610 = vsub.f32 %v608, %v609
    %v611 = vand.u32 %v610, 4294901760
    %612 = vmatpush1.msra.mxu0 %v611
    %613 = vmatprep.subr.mxu0 0.0
    %v614 = vand.u32 %v484, 4294901760
    %v615 = vsub.f32 %v484, %v614
    %v616 = vand.u32 %v615, 4294901760
    %v617 = vsub.f32 %v615, %v616
    %v618 = vand.u32 %v617, 4294901760
    %619 = vmatpush1.msra.mxu0 %v618
    %620 = vmatprep.subr.mxu0 0.0
    %v621 = vand.u32 %v485, 4294901760
    %v622 = vsub.f32 %v485, %v621
    %v623 = vand.u32 %v622, 4294901760
    %v624 = vsub.f32 %v622, %v623
    %v625 = vand.u32 %v624, 4294901760
    %626 = vmatpush1.msra.mxu0 %v625
    %627 = vmatprep.subr.mxu0 0.0
    %v628 = vand.u32 %v486, 4294901760
    %v629 = vsub.f32 %v486, %v628
    %v630 = vand.u32 %v629, 4294901760
    %v631 = vsub.f32 %v629, %v630
    %v632 = vand.u32 %v631, 4294901760
    %633 = vmatpush1.msra.mxu0 %v632
    %634 = vmatprep.subr.mxu0 0.0
    %v635 = vand.u32 %v487, 4294901760
    %v636 = vsub.f32 %v487, %v635
    %v637 = vand.u32 %v636, 4294901760
    %v638 = vsub.f32 %v636, %v637
    %v639 = vand.u32 %v638, 4294901760
    %640 = vmatpush1.msra.mxu0 %v639
    %641 = vmatprep.subr.mxu0 0.0
    %v642 = vand.u32 %v488, 4294901760
    %v643 = vsub.f32 %v488, %v642
    %v644 = vand.u32 %v643, 4294901760
    %v645 = vsub.f32 %v643, %v644
    %v646 = vand.u32 %v645, 4294901760
    %647 = vmatpush1.msra.mxu0 %v646
    %648 = vmatprep.subr.mxu0 0.0
    %v649 = vand.u32 %v489, 4294901760
    %v650 = vsub.f32 %v489, %v649
    %v651 = vand.u32 %v650, 4294901760
    %v652 = vsub.f32 %v650, %v651
    %v653 = vand.u32 %v652, 4294901760
    %654 = vmatpush1.msra.mxu0 %v653
    %655 = vmatprep.subr.mxu0 0.0
    %v656 = vand.u32 %v490, 4294901760
    %v657 = vsub.f32 %v490, %v656
    %v658 = vand.u32 %v657, 4294901760
    %v659 = vsub.f32 %v657, %v658
    %v660 = vand.u32 %v659, 4294901760
    %661 = vmatpush1.msra.mxu0 %v660
    %662 = vmatprep.subr.mxu0 0.0
    %v663 = vand.u32 %v491, 4294901760
    %v664 = vsub.f32 %v491, %v663
    %v665 = vand.u32 %v664, 4294901760
    %v666 = vsub.f32 %v664, %v665
    %v667 = vand.u32 %v666, 4294901760
    %668 = vmatpush1.msra.mxu0 %v667
    %669 = vmatprep.subr.mxu0 0.0
    %v670 = vand.u32 %v492, 4294901760
    %v671 = vsub.f32 %v492, %v670
    %v672 = vand.u32 %v671, 4294901760
    %v673 = vsub.f32 %v671, %v672
    %v674 = vand.u32 %v673, 4294901760
    %675 = vmatpush1.msra.mxu0 %v674
    %676 = vmatprep.subr.mxu0 0.0
    %v677 = vand.u32 %v493, 4294901760
    %v678 = vsub.f32 %v493, %v677
    %v679 = vand.u32 %v678, 4294901760
    %v680 = vsub.f32 %v678, %v679
    %v681 = vand.u32 %v680, 4294901760
    %682 = vmatpush1.msra.mxu0 %v681
    %683 = vmatprep.subr.mxu0 0.0
    %v684 = vand.u32 %v494, 4294901760
    %v685 = vsub.f32 %v494, %v684
    %v686 = vand.u32 %v685, 4294901760
    %v687 = vsub.f32 %v685, %v686
    %v688 = vand.u32 %v687, 4294901760
    %689 = vmatpush1.msra.mxu0 %v688
    %690 = vmatprep.subr.mxu0 0.0
    %v691 = vand.u32 %v495, 4294901760
    %v692 = vsub.f32 %v495, %v691
    %v693 = vand.u32 %v692, 4294901760
    %v694 = vsub.f32 %v692, %v693
    %v695 = vand.u32 %v694, 4294901760
    %696 = vmatpush1.msra.mxu0 %v695
    %697 = vmatprep.subr.mxu0 0.0
    %v698 = vand.u32 %v496, 4294901760
    %v699 = vsub.f32 %v496, %v698
    %v700 = vand.u32 %v699, 4294901760
    %v701 = vsub.f32 %v699, %v700
    %v702 = vand.u32 %v701, 4294901760
    %703 = vmatpush1.msra.mxu0 %v702
    %704 = vmatprep.subr.mxu0 0.0
    %705 = vmatpush1.msra.mxu0 0.0
    %706 = vmatprep.subr.mxu0 0.0
    %707 = vmatpush1.msra.mxu0 0.0
    %708 = vmatprep.subr.mxu0 0.0
    %709 = vmatpush1.msra.mxu0 0.0
    %710 = vmatprep.subr.mxu0 0.0
    %711 = vmatpush1.msra.mxu0 0.0
    %712 = vmatprep.subr.mxu0 0.0
    %713 = vmatpush1.msra.mxu0 0.0
    %714 = vmatprep.subr.mxu0 0.0
    %715 = vmatpush1.msra.mxu0 0.0
    %716 = vmatprep.subr.mxu0 0.0
    %717 = vmatpush1.msra.mxu0 0.0
    %718 = vmatprep.subr.mxu0 0.0
    %719 = vmatpush1.msra.mxu0 0.0
    %720 = vmatprep.subr.mxu0 0.0
    %721 = vmatpush1.msra.mxu0 0.0
    %722 = vmatprep.subr.mxu0 0.0
    %723 = vmatpush1.msra.mxu0 0.0
    %724 = vmatprep.subr.mxu0 0.0
    %725 = vmatpush1.msra.mxu0 0.0
    %726 = vmatprep.subr.mxu0 0.0
    %727 = vmatpush1.msra.mxu0 0.0
    %728 = vmatprep.subr.mxu0 0.0
    %729 = vmatpush1.msra.mxu0 0.0
    %730 = vmatprep.subr.mxu0 0.0
    %731 = vmatpush1.msra.mxu0 0.0
    %732 = vmatprep.subr.mxu0 0.0
    %733 = vmatpush1.msra.mxu0 0.0
    %734 = vmatprep.subr.mxu0 0.0
    %735 = vmatpush1.msra.mxu0 0.0
    %736 = vmatprep.mubr.f32.mxu0 0.0
    %v737 = vand.u32 %v480, 4294901760
    %738 = vmatmul.mubr.f32.gmra.mrb[0].mxu0 %v737
    %v739 = vpop.f32.mrb[0].mxu0
    %v740 = vadd.f32 %v589, %v739
    %v741 = vpop.f32.mrb[0].mxu0
    %742 = vdwg.mxu0
    %743 = vmatprep.subr.mxu0 0.0
    %v744 = vand.u32 %v481, 4294901760
    %v745 = vsub.f32 %v481, %v744
    %746 = vmatpush1.msra.mxu0 %v745
    %747 = vmatprep.subr.mxu0 0.0
    %v748 = vand.u32 %v482, 4294901760
    %v749 = vsub.f32 %v482, %v748
    %750 = vmatpush1.msra.mxu0 %v749
    %751 = vmatprep.subr.mxu0 0.0
    %v752 = vand.u32 %v483, 4294901760
    %v753 = vsub.f32 %v483, %v752
    %754 = vmatpush1.msra.mxu0 %v753
    %755 = vmatprep.subr.mxu0 0.0
    %v756 = vand.u32 %v484, 4294901760
    %v757 = vsub.f32 %v484, %v756
    %758 = vmatpush1.msra.mxu0 %v757
    %759 = vmatprep.subr.mxu0 0.0
    %v760 = vand.u32 %v485, 4294901760
    %v761 = vsub.f32 %v485, %v760
    %762 = vmatpush1.msra.mxu0 %v761
    %763 = vmatprep.subr.mxu0 0.0
    %v764 = vand.u32 %v486, 4294901760
    %v765 = vsub.f32 %v486, %v764
    %766 = vmatpush1.msra.mxu0 %v765
    %767 = vmatprep.subr.mxu0 0.0
    %v768 = vand.u32 %v487, 4294901760
    %v769 = vsub.f32 %v487, %v768
    %770 = vmatpush1.msra.mxu0 %v769
    %771 = vmatprep.subr.mxu0 0.0
    %v772 = vand.u32 %v488, 4294901760
    %v773 = vsub.f32 %v488, %v772
    %774 = vmatpush1.msra.mxu0 %v773
    %775 = vmatprep.subr.mxu0 0.0
    %v776 = vand.u32 %v489, 4294901760
    %v777 = vsub.f32 %v489, %v776
    %778 = vmatpush1.msra.mxu0 %v777
    %779 = vmatprep.subr.mxu0 0.0
    %v780 = vand.u32 %v490, 4294901760
    %v781 = vsub.f32 %v490, %v780
    %782 = vmatpush1.msra.mxu0 %v781
    %783 = vmatprep.subr.mxu0 0.0
    %v784 = vand.u32 %v491, 4294901760
    %v785 = vsub.f32 %v491, %v784
    %786 = vmatpush1.msra.mxu0 %v785
    %787 = vmatprep.subr.mxu0 0.0
    %v788 = vand.u32 %v492, 4294901760
    %v789 = vsub.f32 %v492, %v788
    %790 = vmatpush1.msra.mxu0 %v789
    %791 = vmatprep.subr.mxu0 0.0
    %v792 = vand.u32 %v493, 4294901760
    %v793 = vsub.f32 %v493, %v792
    %794 = vmatpush1.msra.mxu0 %v793
    %795 = vmatprep.subr.mxu0 0.0
    %v796 = vand.u32 %v494, 4294901760
    %v797 = vsub.f32 %v494, %v796
    %798 = vmatpush1.msra.mxu0 %v797
    %799 = vmatprep.subr.mxu0 0.0
    %v800 = vand.u32 %v495, 4294901760
    %v801 = vsub.f32 %v495, %v800
    %802 = vmatpush1.msra.mxu0 %v801
    %803 = vmatprep.subr.mxu0 0.0
    %v804 = vand.u32 %v496, 4294901760
    %v805 = vsub.f32 %v496, %v804
    %806 = vmatpush1.msra.mxu0 %v805
    %807 = vmatprep.subr.mxu0 0.0
    %808 = vmatpush1.msra.mxu0 0.0
    %809 = vmatprep.subr.mxu0 0.0
    %810 = vmatpush1.msra.mxu0 0.0
    %811 = vmatprep.subr.mxu0 0.0
    %812 = vmatpush1.msra.mxu0 0.0
    %813 = vmatprep.subr.mxu0 0.0
    %814 = vmatpush1.msra.mxu0 0.0
    %815 = vmatprep.subr.mxu0 0.0
    %816 = vmatpush1.msra.mxu0 0.0
    %817 = vmatprep.subr.mxu0 0.0
    %818 = vmatpush1.msra.mxu0 0.0
    %819 = vmatprep.subr.mxu0 0.0
    %820 = vmatpush1.msra.mxu0 0.0
    %821 = vmatprep.subr.mxu0 0.0
    %822 = vmatpush1.msra.mxu0 0.0
    %823 = vmatprep.subr.mxu0 0.0
    %824 = vmatpush1.msra.mxu0 0.0
    %825 = vmatprep.subr.mxu0 0.0
    %826 = vmatpush1.msra.mxu0 0.0
    %827 = vmatprep.subr.mxu0 0.0
    %828 = vmatpush1.msra.mxu0 0.0
    %829 = vmatprep.subr.mxu0 0.0
    %830 = vmatpush1.msra.mxu0 0.0
    %831 = vmatprep.subr.mxu0 0.0
    %832 = vmatpush1.msra.mxu0 0.0
    %833 = vmatprep.subr.mxu0 0.0
    %834 = vmatpush1.msra.mxu0 0.0
    %835 = vmatprep.subr.mxu0 0.0
    %836 = vmatpush1.msra.mxu0 0.0
    %837 = vmatprep.subr.mxu0 0.0
    %838 = vmatpush1.msra.mxu0 0.0
    %839 = vmatprep.mubr.f32.mxu0 0.0
    %v840 = vand.u32 %v480, 4294901760
    %v841 = vsub.f32 %v480, %v840
    %842 = vmatmul.mubr.f32.gmra.mrb[0].mxu0 %v841
    %v843 = vpop.f32.mrb[0].mxu0
    %v844 = vadd.f32 %v740, %v843
    %v845 = vpop.f32.mrb[0].mxu0
    %846 = vdwg.mxu0
    %847 = vmatprep.subr.mxu0 0.0
    %v848 = vand.u32 %v481, 4294901760
    %849 = vmatpush1.msra.mxu0 %v848
    %850 = vmatprep.subr.mxu0 0.0
    %v851 = vand.u32 %v482, 4294901760
    %852 = vmatpush1.msra.mxu0 %v851
    %853 = vmatprep.subr.mxu0 0.0
    %v854 = vand.u32 %v483, 4294901760
    %855 = vmatpush1.msra.mxu0 %v854
    %856 = vmatprep.subr.mxu0 0.0
    %v857 = vand.u32 %v484, 4294901760
    %858 = vmatpush1.msra.mxu0 %v857
    %859 = vmatprep.subr.mxu0 0.0
    %v860 = vand.u32 %v485, 4294901760
    %861 = vmatpush1.msra.mxu0 %v860
    %862 = vmatprep.subr.mxu0 0.0
    %v863 = vand.u32 %v486, 4294901760
    %864 = vmatpush1.msra.mxu0 %v863
    %865 = vmatprep.subr.mxu0 0.0
    %v866 = vand.u32 %v487, 4294901760
    %867 = vmatpush1.msra.mxu0 %v866
    %868 = vmatprep.subr.mxu0 0.0
    %v869 = vand.u32 %v488, 4294901760
    %870 = vmatpush1.msra.mxu0 %v869
    %871 = vmatprep.subr.mxu0 0.0
    %v872 = vand.u32 %v489, 4294901760
    %873 = vmatpush1.msra.mxu0 %v872
    %874 = vmatprep.subr.mxu0 0.0
    %v875 = vand.u32 %v490, 4294901760
    %876 = vmatpush1.msra.mxu0 %v875
    %877 = vmatprep.subr.mxu0 0.0
    %v878 = vand.u32 %v491, 4294901760
    %879 = vmatpush1.msra.mxu0 %v878
    %880 = vmatprep.subr.mxu0 0.0
    %v881 = vand.u32 %v492, 4294901760
    %882 = vmatpush1.msra.mxu0 %v881
    %883 = vmatprep.subr.mxu0 0.0
    %v884 = vand.u32 %v493, 4294901760
    %885 = vmatpush1.msra.mxu0 %v884
    %886 = vmatprep.subr.mxu0 0.0
    %v887 = vand.u32 %v494, 4294901760
    %888 = vmatpush1.msra.mxu0 %v887
    %889 = vmatprep.subr.mxu0 0.0
    %v890 = vand.u32 %v495, 4294901760
    %891 = vmatpush1.msra.mxu0 %v890
    %892 = vmatprep.subr.mxu0 0.0
    %v893 = vand.u32 %v496, 4294901760
    %894 = vmatpush1.msra.mxu0 %v893
    %895 = vmatprep.subr.mxu0 0.0
    %896 = vmatpush1.msra.mxu0 0.0
    %897 = vmatprep.subr.mxu0 0.0
    %898 = vmatpush1.msra.mxu0 0.0
    %899 = vmatprep.subr.mxu0 0.0
    %900 = vmatpush1.msra.mxu0 0.0
    %901 = vmatprep.subr.mxu0 0.0
    %902 = vmatpush1.msra.mxu0 0.0
    %903 = vmatprep.subr.mxu0 0.0
    %904 = vmatpush1.msra.mxu0 0.0
    %905 = vmatprep.subr.mxu0 0.0
    %906 = vmatpush1.msra.mxu0 0.0
    %907 = vmatprep.subr.mxu0 0.0
    %908 = vmatpush1.msra.mxu0 0.0
    %909 = vmatprep.subr.mxu0 0.0
    %910 = vmatpush1.msra.mxu0 0.0
    %911 = vmatprep.subr.mxu0 0.0
    %912 = vmatpush1.msra.mxu0 0.0
    %913 = vmatprep.subr.mxu0 0.0
    %914 = vmatpush1.msra.mxu0 0.0
    %915 = vmatprep.subr.mxu0 0.0
    %916 = vmatpush1.msra.mxu0 0.0
    %917 = vmatprep.subr.mxu0 0.0
    %918 = vmatpush1.msra.mxu0 0.0
    %919 = vmatprep.subr.mxu0 0.0
    %920 = vmatpush1.msra.mxu0 0.0
    %921 = vmatprep.subr.mxu0 0.0
    %922 = vmatpush1.msra.mxu0 0.0
    %923 = vmatprep.subr.mxu0 0.0
    %924 = vmatpush1.msra.mxu0 0.0
    %925 = vmatprep.subr.mxu0 0.0
    %926 = vmatpush1.msra.mxu0 0.0
    %927 = vmatprep.mubr.f32.mxu0 0.0
    %v928 = vand.u32 %v480, 4294901760
    %v929 = vsub.f32 %v480, %v928
    %v930 = vand.u32 %v929, 4294901760
    %931 = vmatmul.mubr.f32.gmra.mrb[0].mxu0 %v930
    %v932 = vpop.f32.mrb[0].mxu0
    %v933 = vadd.f32 %v844, %v932
    %v934 = vpop.f32.mrb[0].mxu0
    %935 = vdwg.mxu0
    %936 = vmatprep.subr.mxu0 0.0
    %v937 = vand.u32 %v481, 4294901760
    %v938 = vsub.f32 %v481, %v937
    %v939 = vand.u32 %v938, 4294901760
    %940 = vmatpush1.msra.mxu0 %v939
    %941 = vmatprep.subr.mxu0 0.0
    %v942 = vand.u32 %v482, 4294901760
    %v943 = vsub.f32 %v482, %v942
    %v944 = vand.u32 %v943, 4294901760
    %945 = vmatpush1.msra.mxu0 %v944
    %946 = vmatprep.subr.mxu0 0.0
    %v947 = vand.u32 %v483, 4294901760
    %v948 = vsub.f32 %v483, %v947
    %v949 = vand.u32 %v948, 4294901760
    %950 = vmatpush1.msra.mxu0 %v949
    %951 = vmatprep.subr.mxu0 0.0
    %v952 = vand.u32 %v484, 4294901760
    %v953 = vsub.f32 %v484, %v952
    %v954 = vand.u32 %v953, 4294901760
    %955 = vmatpush1.msra.mxu0 %v954
    %956 = vmatprep.subr.mxu0 0.0
    %v957 = vand.u32 %v485, 4294901760
    %v958 = vsub.f32 %v485, %v957
    %v959 = vand.u32 %v958, 4294901760
    %960 = vmatpush1.msra.mxu0 %v959
    %961 = vmatprep.subr.mxu0 0.0
    %v962 = vand.u32 %v486, 4294901760
    %v963 = vsub.f32 %v486, %v962
    %v964 = vand.u32 %v963, 4294901760
    %965 = vmatpush1.msra.mxu0 %v964
    %966 = vmatprep.subr.mxu0 0.0
    %v967 = vand.u32 %v487, 4294901760
    %v968 = vsub.f32 %v487, %v967
    %v969 = vand.u32 %v968, 4294901760
    %970 = vmatpush1.msra.mxu0 %v969
    %971 = vmatprep.subr.mxu0 0.0
    %v972 = vand.u32 %v488, 4294901760
    %v973 = vsub.f32 %v488, %v972
    %v974 = vand.u32 %v973, 4294901760
    %975 = vmatpush1.msra.mxu0 %v974
    %976 = vmatprep.subr.mxu0 0.0
    %v977 = vand.u32 %v489, 4294901760
    %v978 = vsub.f32 %v489, %v977
    %v979 = vand.u32 %v978, 4294901760
    %980 = vmatpush1.msra.mxu0 %v979
    %981 = vmatprep.subr.mxu0 0.0
    %v982 = vand.u32 %v490, 4294901760
    %v983 = vsub.f32 %v490, %v982
    %v984 = vand.u32 %v983, 4294901760
    %985 = vmatpush1.msra.mxu0 %v984
    %986 = vmatprep.subr.mxu0 0.0
    %v987 = vand.u32 %v491, 4294901760
    %v988 = vsub.f32 %v491, %v987
    %v989 = vand.u32 %v988, 4294901760
    %990 = vmatpush1.msra.mxu0 %v989
    %991 = vmatprep.subr.mxu0 0.0
    %v992 = vand.u32 %v492, 4294901760
    %v993 = vsub.f32 %v492, %v992
    %v994 = vand.u32 %v993, 4294901760
    %995 = vmatpush1.msra.mxu0 %v994
    %996 = vmatprep.subr.mxu0 0.0
    %v997 = vand.u32 %v493, 4294901760
    %v998 = vsub.f32 %v493, %v997
    %v999 = vand.u32 %v998, 4294901760
    %1000 = vmatpush1.msra.mxu0 %v999
    %1001 = vmatprep.subr.mxu0 0.0
    %v1002 = vand.u32 %v494, 4294901760
    %v1003 = vsub.f32 %v494, %v1002
    %v1004 = vand.u32 %v1003, 4294901760
    %1005 = vmatpush1.msra.mxu0 %v1004
    %1006 = vmatprep.subr.mxu0 0.0
    %v1007 = vand.u32 %v495, 4294901760
    %v1008 = vsub.f32 %v495, %v1007
    %v1009 = vand.u32 %v1008, 4294901760
    %1010 = vmatpush1.msra.mxu0 %v1009
    %1011 = vmatprep.subr.mxu0 0.0
    %v1012 = vand.u32 %v496, 4294901760
    %v1013 = vsub.f32 %v496, %v1012
    %v1014 = vand.u32 %v1013, 4294901760
    %1015 = vmatpush1.msra.mxu0 %v1014
    %1016 = vmatprep.subr.mxu0 0.0
    %1017 = vmatpush1.msra.mxu0 0.0
    %1018 = vmatprep.subr.mxu0 0.0
    %1019 = vmatpush1.msra.mxu0 0.0
    %1020 = vmatprep.subr.mxu0 0.0
    %1021 = vmatpush1.msra.mxu0 0.0
    %1022 = vmatprep.subr.mxu0 0.0
    %1023 = vmatpush1.msra.mxu0 0.0
    %1024 = vmatprep.subr.mxu0 0.0
    %1025 = vmatpush1.msra.mxu0 0.0
    %1026 = vmatprep.subr.mxu0 0.0
    %1027 = vmatpush1.msra.mxu0 0.0
    %1028 = vmatprep.subr.mxu0 0.0
    %1029 = vmatpush1.msra.mxu0 0.0
    %1030 = vmatprep.subr.mxu0 0.0
    %1031 = vmatpush1.msra.mxu0 0.0
    %1032 = vmatprep.subr.mxu0 0.0
    %1033 = vmatpush1.msra.mxu0 0.0
    %1034 = vmatprep.subr.mxu0 0.0
    %1035 = vmatpush1.msra.mxu0 0.0
    %1036 = vmatprep.subr.mxu0 0.0
    %1037 = vmatpush1.msra.mxu0 0.0
    %1038 = vmatprep.subr.mxu0 0.0
    %1039 = vmatpush1.msra.mxu0 0.0
    %1040 = vmatprep.subr.mxu0 0.0
    %1041 = vmatpush1.msra.mxu0 0.0
    %1042 = vmatprep.subr.mxu0 0.0
    %1043 = vmatpush1.msra.mxu0 0.0
    %1044 = vmatprep.subr.mxu0 0.0
    %1045 = vmatpush1.msra.mxu0 0.0
    %1046 = vmatprep.subr.mxu0 0.0
    %1047 = vmatpush1.msra.mxu0 0.0
    %1048 = vmatprep.mubr.f32.mxu0 0.0
    %v1049 = vand.u32 %v480, 4294901760
    %1050 = vmatmul.mubr.f32.gmra.mrb[0].mxu0 %v1049
    %v1051 = vpop.f32.mrb[0].mxu0
    %v1052 = vadd.f32 %v933, %v1051
    %v1053 = vpop.f32.mrb[0].mxu0
    %1054 = vdwg.mxu0
    %1055 = vmatprep.subr.mxu0 0.0
    %v1056 = vand.u32 %v481, 4294901760
    %1057 = vmatpush1.msra.mxu0 %v1056
    %1058 = vmatprep.subr.mxu0 0.0
    %v1059 = vand.u32 %v482, 4294901760
    %1060 = vmatpush1.msra.mxu0 %v1059
    %1061 = vmatprep.subr.mxu0 0.0
    %v1062 = vand.u32 %v483, 4294901760
    %1063 = vmatpush1.msra.mxu0 %v1062
    %1064 = vmatprep.subr.mxu0 0.0
    %v1065 = vand.u32 %v484, 4294901760
    %1066 = vmatpush1.msra.mxu0 %v1065
    %1067 = vmatprep.subr.mxu0 0.0
    %v1068 = vand.u32 %v485, 4294901760
    %1069 = vmatpush1.msra.mxu0 %v1068
    %1070 = vmatprep.subr.mxu0 0.0
    %v1071 = vand.u32 %v486, 4294901760
    %1072 = vmatpush1.msra.mxu0 %v1071
    %1073 = vmatprep.subr.mxu0 0.0
    %v1074 = vand.u32 %v487, 4294901760
    %1075 = vmatpush1.msra.mxu0 %v1074
    %1076 = vmatprep.subr.mxu0 0.0
    %v1077 = vand.u32 %v488, 4294901760
    %1078 = vmatpush1.msra.mxu0 %v1077
    %1079 = vmatprep.subr.mxu0 0.0
    %v1080 = vand.u32 %v489, 4294901760
    %1081 = vmatpush1.msra.mxu0 %v1080
    %1082 = vmatprep.subr.mxu0 0.0
    %v1083 = vand.u32 %v490, 4294901760
    %1084 = vmatpush1.msra.mxu0 %v1083
    %1085 = vmatprep.subr.mxu0 0.0
    %v1086 = vand.u32 %v491, 4294901760
    %1087 = vmatpush1.msra.mxu0 %v1086
    %1088 = vmatprep.subr.mxu0 0.0
    %v1089 = vand.u32 %v492, 4294901760
    %1090 = vmatpush1.msra.mxu0 %v1089
    %1091 = vmatprep.subr.mxu0 0.0
    %v1092 = vand.u32 %v493, 4294901760
    %1093 = vmatpush1.msra.mxu0 %v1092
    %1094 = vmatprep.subr.mxu0 0.0
    %v1095 = vand.u32 %v494, 4294901760
    %1096 = vmatpush1.msra.mxu0 %v1095
    %1097 = vmatprep.subr.mxu0 0.0
    %v1098 = vand.u32 %v495, 4294901760
    %1099 = vmatpush1.msra.mxu0 %v1098
    %1100 = vmatprep.subr.mxu0 0.0
    %v1101 = vand.u32 %v496, 4294901760
    %1102 = vmatpush1.msra.mxu0 %v1101
    %1103 = vmatprep.subr.mxu0 0.0
    %1104 = vmatpush1.msra.mxu0 0.0
    %1105 = vmatprep.subr.mxu0 0.0
    %1106 = vmatpush1.msra.mxu0 0.0
    %1107 = vmatprep.subr.mxu0 0.0
    %1108 = vmatpush1.msra.mxu0 0.0
    %1109 = vmatprep.subr.mxu0 0.0
    %1110 = vmatpush1.msra.mxu0 0.0
    %1111 = vmatprep.subr.mxu0 0.0
    %1112 = vmatpush1.msra.mxu0 0.0
    %1113 = vmatprep.subr.mxu0 0.0
    %1114 = vmatpush1.msra.mxu0 0.0
    %1115 = vmatprep.subr.mxu0 0.0
    %1116 = vmatpush1.msra.mxu0 0.0
    %1117 = vmatprep.subr.mxu0 0.0
    %1118 = vmatpush1.msra.mxu0 0.0
    %1119 = vmatprep.subr.mxu0 0.0
    %1120 = vmatpush1.msra.mxu0 0.0
    %1121 = vmatprep.subr.mxu0 0.0
    %1122 = vmatpush1.msra.mxu0 0.0
    %1123 = vmatprep.subr.mxu0 0.0
    %1124 = vmatpush1.msra.mxu0 0.0
    %1125 = vmatprep.subr.mxu0 0.0
    %1126 = vmatpush1.msra.mxu0 0.0
    %1127 = vmatprep.subr.mxu0 0.0
    %1128 = vmatpush1.msra.mxu0 0.0
    %1129 = vmatprep.subr.mxu0 0.0
    %1130 = vmatpush1.msra.mxu0 0.0
    %1131 = vmatprep.subr.mxu0 0.0
    %1132 = vmatpush1.msra.mxu0 0.0
    %1133 = vmatprep.subr.mxu0 0.0
    %1134 = vmatpush1.msra.mxu0 0.0
    %1135 = vmatprep.mubr.f32.mxu0 0.0
    %v1136 = vand.u32 %v480, 4294901760
    %1137 = vmatmul.mubr.f32.gmra.mrb[0].mxu0 %v1136
    %v1138 = vpop.f32.mrb[0].mxu0
    %v1139 = vadd.f32 %v1052, %v1138
    %v1140 = vpop.f32.mrb[0].mxu0
    %1141 = vdwg.mxu0
    %v1142 = vmax.f32 %v1139, 0.0
    %v1143 = vld [vmem:[%s4] sm:$0xff]
    %v1144 = vld [vmem:[%s4 + $0x8] sm:$0xff]
    %v1145 = vld [vmem:[%s4 + $0x10] sm:$0xff]
    %v1146 = vld [vmem:[%s4 + $0x18] sm:$0xff]
    %v1147 = vlaneseq
    %v1148 = vshrl.u32 %v1147, 7
    %v1149 = vsub.s32 0, %v1148
    %v1150 = vrot.slane %v23, %v1149
    %vm1151 = vcmask 261120
    %v1153 = vsel %vm1151, %v1142, 0
    %1155 = vmatprep.subr.mxu0 0.0
    %v1156 = vand.u32 %v1143, 4294901760
    %1157 = vmatpush1.msra.mxu0 %v1156
    %1158 = vmatprep.subr.mxu0 0.0
    %v1159 = vand.u32 %v1144, 4294901760
    %1160 = vmatpush1.msra.mxu0 %v1159
    %1161 = vmatprep.subr.mxu0 0.0
    %v1162 = vand.u32 %v1145, 4294901760
    %1163 = vmatpush1.msra.mxu0 %v1162
    %1164 = vmatprep.subr.mxu0 0.0
    %v1165 = vand.u32 %v1146, 4294901760
    %1166 = vmatpush1.msra.mxu0 %v1165
    %1167 = vmatprep.subr.mxu0 0.0
    %1168 = vmatpush1.msra.mxu0 0.0
    %1169 = vmatprep.subr.mxu0 0.0
    %1170 = vmatpush1.msra.mxu0 0.0
    %1171 = vmatprep.subr.mxu0 0.0
    %1172 = vmatpush1.msra.mxu0 0.0
    %1173 = vmatprep.subr.mxu0 0.0
    %1174 = vmatpush1.msra.mxu0 0.0
    %1175 = vmatprep.subr.mxu0 0.0
    %1176 = vmatpush1.msra.mxu0 0.0
    %1177 = vmatprep.subr.mxu0 0.0
    %1178 = vmatpush1.msra.mxu0 0.0
    %1179 = vmatprep.subr.mxu0 0.0
    %1180 = vmatpush1.msra.mxu0 0.0
    %1181 = vmatprep.subr.mxu0 0.0
    %1182 = vmatpush1.msra.mxu0 0.0
    %1183 = vmatprep.subr.mxu0 0.0
    %1184 = vmatpush1.msra.mxu0 0.0
    %1185 = vmatprep.subr.mxu0 0.0
    %1186 = vmatpush1.msra.mxu0 0.0
    %1187 = vmatprep.subr.mxu0 0.0
    %1188 = vmatpush1.msra.mxu0 0.0
    %1189 = vmatprep.subr.mxu0 0.0
    %1190 = vmatpush1.msra.mxu0 0.0
    %1191 = vmatprep.subr.mxu0 0.0
    %1192 = vmatpush1.msra.mxu0 0.0
    %1193 = vmatprep.subr.mxu0 0.0
    %1194 = vmatpush1.msra.mxu0 0.0
    %1195 = vmatprep.subr.mxu0 0.0
    %1196 = vmatpush1.msra.mxu0 0.0
    %1197 = vmatprep.subr.mxu0 0.0
    %1198 = vmatpush1.msra.mxu0 0.0
    %1199 = vmatprep.subr.mxu0 0.0
    %1200 = vmatpush1.msra.mxu0 0.0
    %1201 = vmatprep.subr.mxu0 0.0
    %1202 = vmatpush1.msra.mxu0 0.0
    %1203 = vmatprep.subr.mxu0 0.0
    %1204 = vmatpush1.msra.mxu0 0.0
    %1205 = vmatprep.subr.mxu0 0.0
    %1206 = vmatpush1.msra.mxu0 0.0
    %1207 = vmatprep.subr.mxu0 0.0
    %1208 = vmatpush1.msra.mxu0 0.0
    %1209 = vmatprep.subr.mxu0 0.0
    %1210 = vmatpush1.msra.mxu0 0.0
    %1211 = vmatprep.subr.mxu0 0.0
    %1212 = vmatpush1.msra.mxu0 0.0
    %1213 = vmatprep.subr.mxu0 0.0
    %1214 = vmatpush1.msra.mxu0 0.0
    %1215 = vmatprep.subr.mxu0 0.0
    %1216 = vmatpush1.msra.mxu0 0.0
    %1217 = vmatprep.subr.mxu0 0.0
    %1218 = vmatpush1.msra.mxu0 0.0
    %1219 = vmatprep.subr.mxu0 0.0
    %1220 = vmatpush1.msra.mxu0 0.0
    %1221 = vmatprep.subr.mxu0 0.0
    %1222 = vmatpush1.msra.mxu0 0.0
    %1223 = vmatprep.mubr.f32.mxu0 0.0
    %v1224 = vand.u32 %v1153, 4294901760
    %v1225 = vsub.f32 %v1153, %v1224
    %v1226 = vand.u32 %v1225, 4294901760
    %v1227 = vsub.f32 %v1225, %v1226
    %v1228 = vand.u32 %v1227, 4294901760
    %1229 = vmatmul.mubr.f32.gmra.mrb[0].mxu0 %v1228
    %v1230 = vpop.f32.mrb[0].mxu0
    %v1231 = vadd.f32 %v1150, %v1230
    %v1232 = vpop.f32.mrb[0].mxu0
    %1233 = vdwg.mxu0
    %1234 = vmatprep.subr.mxu0 0.0
    %v1235 = vand.u32 %v1143, 4294901760
    %v1236 = vsub.f32 %v1143, %v1235
    %v1237 = vand.u32 %v1236, 4294901760
    %v1238 = vsub.f32 %v1236, %v1237
    %v1239 = vand.u32 %v1238, 4294901760
    %1240 = vmatpush1.msra.mxu0 %v1239
    %1241 = vmatprep.subr.mxu0 0.0
    %v1242 = vand.u32 %v1144, 4294901760
    %v1243 = vsub.f32 %v1144, %v1242
    %v1244 = vand.u32 %v1243, 4294901760
    %v1245 = vsub.f32 %v1243, %v1244
    %v1246 = vand.u32 %v1245, 4294901760
    %1247 = vmatpush1.msra.mxu0 %v1246
    %1248 = vmatprep.subr.mxu0 0.0
    %v1249 = vand.u32 %v1145, 4294901760
    %v1250 = vsub.f32 %v1145, %v1249
    %v1251 = vand.u32 %v1250, 4294901760
    %v1252 = vsub.f32 %v1250, %v1251
    %v1253 = vand.u32 %v1252, 4294901760
    %1254 = vmatpush1.msra.mxu0 %v1253
    %1255 = vmatprep.subr.mxu0 0.0
    %v1256 = vand.u32 %v1146, 4294901760
    %v1257 = vsub.f32 %v1146, %v1256
    %v1258 = vand.u32 %v1257, 4294901760
    %v1259 = vsub.f32 %v1257, %v1258
    %v1260 = vand.u32 %v1259, 4294901760
    %1261 = vmatpush1.msra.mxu0 %v1260
    %1262 = vmatprep.subr.mxu0 0.0
    %1263 = vmatpush1.msra.mxu0 0.0
    %1264 = vmatprep.subr.mxu0 0.0
    %1265 = vmatpush1.msra.mxu0 0.0
    %1266 = vmatprep.subr.mxu0 0.0
    %1267 = vmatpush1.msra.mxu0 0.0
    %1268 = vmatprep.subr.mxu0 0.0
    %1269 = vmatpush1.msra.mxu0 0.0
    %1270 = vmatprep.subr.mxu0 0.0
    %1271 = vmatpush1.msra.mxu0 0.0
    %1272 = vmatprep.subr.mxu0 0.0
    %1273 = vmatpush1.msra.mxu0 0.0
    %1274 = vmatprep.subr.mxu0 0.0
    %1275 = vmatpush1.msra.mxu0 0.0
    %1276 = vmatprep.subr.mxu0 0.0
    %1277 = vmatpush1.msra.mxu0 0.0
    %1278 = vmatprep.subr.mxu0 0.0
    %1279 = vmatpush1.msra.mxu0 0.0
    %1280 = vmatprep.subr.mxu0 0.0
    %1281 = vmatpush1.msra.mxu0 0.0
    %1282 = vmatprep.subr.mxu0 0.0
    %1283 = vmatpush1.msra.mxu0 0.0
    %1284 = vmatprep.subr.mxu0 0.0
    %1285 = vmatpush1.msra.mxu0 0.0
    %1286 = vmatprep.subr.mxu0 0.0
    %1287 = vmatpush1.msra.mxu0 0.0
    %1288 = vmatprep.subr.mxu0 0.0
    %1289 = vmatpush1.msra.mxu0 0.0
    %1290 = vmatprep.subr.mxu0 0.0
    %1291 = vmatpush1.msra.mxu0 0.0
    %1292 = vmatprep.subr.mxu0 0.0
    %1293 = vmatpush1.msra.mxu0 0.0
    %1294 = vmatprep.subr.mxu0 0.0
    %1295 = vmatpush1.msra.mxu0 0.0
    %1296 = vmatprep.subr.mxu0 0.0
    %1297 = vmatpush1.msra.mxu0 0.0
    %1298 = vmatprep.subr.mxu0 0.0
    %1299 = vmatpush1.msra.mxu0 0.0
    %1300 = vmatprep.subr.mxu0 0.0
    %1301 = vmatpush1.msra.mxu0 0.0
    %1302 = vmatprep.subr.mxu0 0.0
    %1303 = vmatpush1.msra.mxu0 0.0
    %1304 = vmatprep.subr.mxu0 0.0
    %1305 = vmatpush1.msra.mxu0 0.0
    %1306 = vmatprep.subr.mxu0 0.0
    %1307 = vmatpush1.msra.mxu0 0.0
    %1308 = vmatprep.subr.mxu0 0.0
    %1309 = vmatpush1.msra.mxu0 0.0
    %1310 = vmatprep.subr.mxu0 0.0
    %1311 = vmatpush1.msra.mxu0 0.0
    %1312 = vmatprep.subr.mxu0 0.0
    %1313 = vmatpush1.msra.mxu0 0.0
    %1314 = vmatprep.subr.mxu0 0.0
    %1315 = vmatpush1.msra.mxu0 0.0
    %1316 = vmatprep.subr.mxu0 0.0
    %1317 = vmatpush1.msra.mxu0 0.0
    %1318 = vmatprep.mubr.f32.mxu0 0.0
    %v1319 = vand.u32 %v1153, 4294901760
    %1320 = vmatmul.mubr.f32.gmra.mrb[0].mxu0 %v1319
    %v1321 = vpop.f32.mrb[0].mxu0
    %v1322 = vadd.f32 %v1231, %v1321
    %v1323 = vpop.f32.mrb[0].mxu0
    %1324 = vdwg.mxu0
    %1325 = vmatprep.subr.mxu0 0.0
    %v1326 = vand.u32 %v1143, 4294901760
    %v1327 = vsub.f32 %v1143, %v1326
    %1328 = vmatpush1.msra.mxu0 %v1327
    %1329 = vmatprep.subr.mxu0 0.0
    %v1330 = vand.u32 %v1144, 4294901760
    %v1331 = vsub.f32 %v1144, %v1330
    %1332 = vmatpush1.msra.mxu0 %v1331
    %1333 = vmatprep.subr.mxu0 0.0
    %v1334 = vand.u32 %v1145, 4294901760
    %v1335 = vsub.f32 %v1145, %v1334
    %1336 = vmatpush1.msra.mxu0 %v1335
    %1337 = vmatprep.subr.mxu0 0.0
    %v1338 = vand.u32 %v1146, 4294901760
    %v1339 = vsub.f32 %v1146, %v1338
    %1340 = vmatpush1.msra.mxu0 %v1339
    %1341 = vmatprep.subr.mxu0 0.0
    %1342 = vmatpush1.msra.mxu0 0.0
    %1343 = vmatprep.subr.mxu0 0.0
    %1344 = vmatpush1.msra.mxu0 0.0
    %1345 = vmatprep.subr.mxu0 0.0
    %1346 = vmatpush1.msra.mxu0 0.0
    %1347 = vmatprep.subr.mxu0 0.0
    %1348 = vmatpush1.msra.mxu0 0.0
    %1349 = vmatprep.subr.mxu0 0.0
    %1350 = vmatpush1.msra.mxu0 0.0
    %1351 = vmatprep.subr.mxu0 0.0
    %1352 = vmatpush1.msra.mxu0 0.0
    %1353 = vmatprep.subr.mxu0 0.0
    %1354 = vmatpush1.msra.mxu0 0.0
    %1355 = vmatprep.subr.mxu0 0.0
    %1356 = vmatpush1.msra.mxu0 0.0
    %1357 = vmatprep.subr.mxu0 0.0
    %1358 = vmatpush1.msra.mxu0 0.0
    %1359 = vmatprep.subr.mxu0 0.0
    %1360 = vmatpush1.msra.mxu0 0.0
    %1361 = vmatprep.subr.mxu0 0.0
    %1362 = vmatpush1.msra.mxu0 0.0
    %1363 = vmatprep.subr.mxu0 0.0
    %1364 = vmatpush1.msra.mxu0 0.0
    %1365 = vmatprep.subr.mxu0 0.0
    %1366 = vmatpush1.msra.mxu0 0.0
    %1367 = vmatprep.subr.mxu0 0.0
    %1368 = vmatpush1.msra.mxu0 0.0
    %1369 = vmatprep.subr.mxu0 0.0
    %1370 = vmatpush1.msra.mxu0 0.0
    %1371 = vmatprep.subr.mxu0 0.0
    %1372 = vmatpush1.msra.mxu0 0.0
    %1373 = vmatprep.subr.mxu0 0.0
    %1374 = vmatpush1.msra.mxu0 0.0
    %1375 = vmatprep.subr.mxu0 0.0
    %1376 = vmatpush1.msra.mxu0 0.0
    %1377 = vmatprep.subr.mxu0 0.0
    %1378 = vmatpush1.msra.mxu0 0.0
    %1379 = vmatprep.subr.mxu0 0.0
    %1380 = vmatpush1.msra.mxu0 0.0
    %1381 = vmatprep.subr.mxu0 0.0
    %1382 = vmatpush1.msra.mxu0 0.0
    %1383 = vmatprep.subr.mxu0 0.0
    %1384 = vmatpush1.msra.mxu0 0.0
    %1385 = vmatprep.subr.mxu0 0.0
    %1386 = vmatpush1.msra.mxu0 0.0
    %1387 = vmatprep.subr.mxu0 0.0
    %1388 = vmatpush1.msra.mxu0 0.0
    %1389 = vmatprep.subr.mxu0 0.0
    %1390 = vmatpush1.msra.mxu0 0.0
    %1391 = vmatprep.subr.mxu0 0.0
    %1392 = vmatpush1.msra.mxu0 0.0
    %1393 = vmatprep.subr.mxu0 0.0
    %1394 = vmatpush1.msra.mxu0 0.0
    %1395 = vmatprep.subr.mxu0 0.0
    %1396 = vmatpush1.msra.mxu0 0.0
    %1397 = vmatprep.mubr.f32.mxu0 0.0
    %v1398 = vand.u32 %v1153, 4294901760
    %v1399 = vsub.f32 %v1153, %v1398
    %1400 = vmatmul.mubr.f32.gmra.mrb[0].mxu0 %v1399
    %v1401 = vpop.f32.mrb[0].mxu0
    %v1402 = vadd.f32 %v1322, %v1401
    %v1403 = vpop.f32.mrb[0].mxu0
    %1404 = vdwg.mxu0
    %1405 = vmatprep.subr.mxu0 0.0
    %v1406 = vand.u32 %v1143, 4294901760
    %1407 = vmatpush1.msra.mxu0 %v1406
    %1408 = vmatprep.subr.mxu0 0.0
    %v1409 = vand.u32 %v1144, 4294901760
    %1410 = vmatpush1.msra.mxu0 %v1409
    %1411 = vmatprep.subr.mxu0 0.0
    %v1412 = vand.u32 %v1145, 4294901760
    %1413 = vmatpush1.msra.mxu0 %v1412
    %1414 = vmatprep.subr.mxu0 0.0
    %v1415 = vand.u32 %v1146, 4294901760
    %1416 = vmatpush1.msra.mxu0 %v1415
    %1417 = vmatprep.subr.mxu0 0.0
    %1418 = vmatpush1.msra.mxu0 0.0
    %1419 = vmatprep.subr.mxu0 0.0
    %1420 = vmatpush1.msra.mxu0 0.0
    %1421 = vmatprep.subr.mxu0 0.0
    %1422 = vmatpush1.msra.mxu0 0.0
    %1423 = vmatprep.subr.mxu0 0.0
    %1424 = vmatpush1.msra.mxu0 0.0
    %1425 = vmatprep.subr.mxu0 0.0
    %1426 = vmatpush1.msra.mxu0 0.0
    %1427 = vmatprep.subr.mxu0 0.0
    %1428 = vmatpush1.msra.mxu0 0.0
    %1429 = vmatprep.subr.mxu0 0.0
    %1430 = vmatpush1.msra.mxu0 0.0
    %1431 = vmatprep.subr.mxu0 0.0
    %1432 = vmatpush1.msra.mxu0 0.0
    %1433 = vmatprep.subr.mxu0 0.0
    %1434 = vmatpush1.msra.mxu0 0.0
    %1435 = vmatprep.subr.mxu0 0.0
    %1436 = vmatpush1.msra.mxu0 0.0
    %1437 = vmatprep.subr.mxu0 0.0
    %1438 = vmatpush1.msra.mxu0 0.0
    %1439 = vmatprep.subr.mxu0 0.0
    %1440 = vmatpush1.msra.mxu0 0.0
    %1441 = vmatprep.subr.mxu0 0.0
    %1442 = vmatpush1.msra.mxu0 0.0
    %1443 = vmatprep.subr.mxu0 0.0
    %1444 = vmatpush1.msra.mxu0 0.0
    %1445 = vmatprep.subr.mxu0 0.0
    %1446 = vmatpush1.msra.mxu0 0.0
    %1447 = vmatprep.subr.mxu0 0.0
    %1448 = vmatpush1.msra.mxu0 0.0
    %1449 = vmatprep.subr.mxu0 0.0
    %1450 = vmatpush1.msra.mxu0 0.0
    %1451 = vmatprep.subr.mxu0 0.0
    %1452 = vmatpush1.msra.mxu0 0.0
    %1453 = vmatprep.subr.mxu0 0.0
    %1454 = vmatpush1.msra.mxu0 0.0
    %1455 = vmatprep.subr.mxu0 0.0
    %1456 = vmatpush1.msra.mxu0 0.0
    %1457 = vmatprep.subr.mxu0 0.0
    %1458 = vmatpush1.msra.mxu0 0.0
    %1459 = vmatprep.subr.mxu0 0.0
    %1460 = vmatpush1.msra.mxu0 0.0
    %1461 = vmatprep.subr.mxu0 0.0
    %1462 = vmatpush1.msra.mxu0 0.0
    %1463 = vmatprep.subr.mxu0 0.0
    %1464 = vmatpush1.msra.mxu0 0.0
    %1465 = vmatprep.subr.mxu0 0.0
    %1466 = vmatpush1.msra.mxu0 0.0
    %1467 = vmatprep.subr.mxu0 0.0
    %1468 = vmatpush1.msra.mxu0 0.0
    %1469 = vmatprep.subr.mxu0 0.0
    %1470 = vmatpush1.msra.mxu0 0.0
    %1471 = vmatprep.subr.mxu0 0.0
    %1472 = vmatpush1.msra.mxu0 0.0
    %1473 = vmatprep.mubr.f32.mxu0 0.0
    %v1474 = vand.u32 %v1153, 4294901760
    %v1475 = vsub.f32 %v1153, %v1474
    %v1476 = vand.u32 %v1475, 4294901760
    %1477 = vmatmul.mubr.f32.gmra.mrb[0].mxu0 %v1476
    %v1478 = vpop.f32.mrb[0].mxu0
    %v1479 = vadd.f32 %v1402, %v1478
    %v1480 = vpop.f32.mrb[0].mxu0
    %1481 = vdwg.mxu0
    %1482 = vmatprep.subr.mxu0 0.0
    %v1483 = vand.u32 %v1143, 4294901760
    %v1484 = vsub.f32 %v1143, %v1483
    %v1485 = vand.u32 %v1484, 4294901760
    %1486 = vmatpush1.msra.mxu0 %v1485
    %1487 = vmatprep.subr.mxu0 0.0
    %v1488 = vand.u32 %v1144, 4294901760
    %v1489 = vsub.f32 %v1144, %v1488
    %v1490 = vand.u32 %v1489, 4294901760
    %1491 = vmatpush1.msra.mxu0 %v1490
    %1492 = vmatprep.subr.mxu0 0.0
    %v1493 = vand.u32 %v1145, 4294901760
    %v1494 = vsub.f32 %v1145, %v1493
    %v1495 = vand.u32 %v1494, 4294901760
    %1496 = vmatpush1.msra.mxu0 %v1495
    %1497 = vmatprep.subr.mxu0 0.0
    %v1498 = vand.u32 %v1146, 4294901760
    %v1499 = vsub.f32 %v1146, %v1498
    %v1500 = vand.u32 %v1499, 4294901760
    %1501 = vmatpush1.msra.mxu0 %v1500
    %1502 = vmatprep.subr.mxu0 0.0
    %1503 = vmatpush1.msra.mxu0 0.0
    %1504 = vmatprep.subr.mxu0 0.0
    %1505 = vmatpush1.msra.mxu0 0.0
    %1506 = vmatprep.subr.mxu0 0.0
    %1507 = vmatpush1.msra.mxu0 0.0
    %1508 = vmatprep.subr.mxu0 0.0
    %1509 = vmatpush1.msra.mxu0 0.0
    %1510 = vmatprep.subr.mxu0 0.0
    %1511 = vmatpush1.msra.mxu0 0.0
    %1512 = vmatprep.subr.mxu0 0.0
    %1513 = vmatpush1.msra.mxu0 0.0
    %1514 = vmatprep.subr.mxu0 0.0
    %1515 = vmatpush1.msra.mxu0 0.0
    %1516 = vmatprep.subr.mxu0 0.0
    %1517 = vmatpush1.msra.mxu0 0.0
    %1518 = vmatprep.subr.mxu0 0.0
    %1519 = vmatpush1.msra.mxu0 0.0
    %1520 = vmatprep.subr.mxu0 0.0
    %1521 = vmatpush1.msra.mxu0 0.0
    %1522 = vmatprep.subr.mxu0 0.0
    %1523 = vmatpush1.msra.mxu0 0.0
    %1524 = vmatprep.subr.mxu0 0.0
    %1525 = vmatpush1.msra.mxu0 0.0
    %1526 = vmatprep.subr.mxu0 0.0
    %1527 = vmatpush1.msra.mxu0 0.0
    %1528 = vmatprep.subr.mxu0 0.0
    %1529 = vmatpush1.msra.mxu0 0.0
    %1530 = vmatprep.subr.mxu0 0.0
    %1531 = vmatpush1.msra.mxu0 0.0
    %1532 = vmatprep.subr.mxu0 0.0
    %1533 = vmatpush1.msra.mxu0 0.0
    %1534 = vmatprep.subr.mxu0 0.0
    %1535 = vmatpush1.msra.mxu0 0.0
    %1536 = vmatprep.subr.mxu0 0.0
    %1537 = vmatpush1.msra.mxu0 0.0
    %1538 = vmatprep.subr.mxu0 0.0
    %1539 = vmatpush1.msra.mxu0 0.0
    %1540 = vmatprep.subr.mxu0 0.0
    %1541 = vmatpush1.msra.mxu0 0.0
    %1542 = vmatprep.subr.mxu0 0.0
    %1543 = vmatpush1.msra.mxu0 0.0
    %1544 = vmatprep.subr.mxu0 0.0
    %1545 = vmatpush1.msra.mxu0 0.0
    %1546 = vmatprep.subr.mxu0 0.0
    %1547 = vmatpush1.msra.mxu0 0.0
    %1548 = vmatprep.subr.mxu0 0.0
    %1549 = vmatpush1.msra.mxu0 0.0
    %1550 = vmatprep.subr.mxu0 0.0
    %1551 = vmatpush1.msra.mxu0 0.0
    %1552 = vmatprep.subr.mxu0 0.0
    %1553 = vmatpush1.msra.mxu0 0.0
    %1554 = vmatprep.subr.mxu0 0.0
    %1555 = vmatpush1.msra.mxu0 0.0
    %1556 = vmatprep.subr.mxu0 0.0
    %1557 = vmatpush1.msra.mxu0 0.0
    %1558 = vmatprep.mubr.f32.mxu0 0.0
    %v1559 = vand.u32 %v1153, 4294901760
    %1560 = vmatmul.mubr.f32.gmra.mrb[0].mxu0 %v1559
    %v1561 = vpop.f32.mrb[0].mxu0
    %v1562 = vadd.f32 %v1479, %v1561
    %v1563 = vpop.f32.mrb[0].mxu0
    %1564 = vdwg.mxu0
    %1565 = vmatprep.subr.mxu0 0.0
    %v1566 = vand.u32 %v1143, 4294901760
    %1567 = vmatpush1.msra.mxu0 %v1566
    %1568 = vmatprep.subr.mxu0 0.0
    %v1569 = vand.u32 %v1144, 4294901760
    %1570 = vmatpush1.msra.mxu0 %v1569
    %1571 = vmatprep.subr.mxu0 0.0
    %v1572 = vand.u32 %v1145, 4294901760
    %1573 = vmatpush1.msra.mxu0 %v1572
    %1574 = vmatprep.subr.mxu0 0.0
    %v1575 = vand.u32 %v1146, 4294901760
    %1576 = vmatpush1.msra.mxu0 %v1575
    %1577 = vmatprep.subr.mxu0 0.0
    %1578 = vmatpush1.msra.mxu0 0.0
    %1579 = vmatprep.subr.mxu0 0.0
    %1580 = vmatpush1.msra.mxu0 0.0
    %1581 = vmatprep.subr.mxu0 0.0
    %1582 = vmatpush1.msra.mxu0 0.0
    %1583 = vmatprep.subr.mxu0 0.0
    %1584 = vmatpush1.msra.mxu0 0.0
    %1585 = vmatprep.subr.mxu0 0.0
    %1586 = vmatpush1.msra.mxu0 0.0
    %1587 = vmatprep.subr.mxu0 0.0
    %1588 = vmatpush1.msra.mxu0 0.0
    %1589 = vmatprep.subr.mxu0 0.0
    %1590 = vmatpush1.msra.mxu0 0.0
    %1591 = vmatprep.subr.mxu0 0.0
    %1592 = vmatpush1.msra.mxu0 0.0
    %1593 = vmatprep.subr.mxu0 0.0
    %1594 = vmatpush1.msra.mxu0 0.0
    %1595 = vmatprep.subr.mxu0 0.0
    %1596 = vmatpush1.msra.mxu0 0.0
    %1597 = vmatprep.subr.mxu0 0.0
    %1598 = vmatpush1.msra.mxu0 0.0
    %1599 = vmatprep.subr.mxu0 0.0
    %1600 = vmatpush1.msra.mxu0 0.0
    %1601 = vmatprep.subr.mxu0 0.0
    %1602 = vmatpush1.msra.mxu0 0.0
    %1603 = vmatprep.subr.mxu0 0.0
    %1604 = vmatpush1.msra.mxu0 0.0
    %1605 = vmatprep.subr.mxu0 0.0
    %1606 = vmatpush1.msra.mxu0 0.0
    %1607 = vmatprep.subr.mxu0 0.0
    %1608 = vmatpush1.msra.mxu0 0.0
    %1609 = vmatprep.subr.mxu0 0.0
    %1610 = vmatpush1.msra.mxu0 0.0
    %1611 = vmatprep.subr.mxu0 0.0
    %1612 = vmatpush1.msra.mxu0 0.0
    %1613 = vmatprep.subr.mxu0 0.0
    %1614 = vmatpush1.msra.mxu0 0.0
    %1615 = vmatprep.subr.mxu0 0.0
    %1616 = vmatpush1.msra.mxu0 0.0
    %1617 = vmatprep.subr.mxu0 0.0
    %1618 = vmatpush1.msra.mxu0 0.0
    %1619 = vmatprep.subr.mxu0 0.0
    %1620 = vmatpush1.msra.mxu0 0.0
    %1621 = vmatprep.subr.mxu0 0.0
    %1622 = vmatpush1.msra.mxu0 0.0
    %1623 = vmatprep.subr.mxu0 0.0
    %1624 = vmatpush1.msra.mxu0 0.0
    %1625 = vmatprep.subr.mxu0 0.0
    %1626 = vmatpush1.msra.mxu0 0.0
    %1627 = vmatprep.subr.mxu0 0.0
    %1628 = vmatpush1.msra.mxu0 0.0
    %1629 = vmatprep.subr.mxu0 0.0
    %1630 = vmatpush1.msra.mxu0 0.0
    %1631 = vmatprep.subr.mxu0 0.0
    %1632 = vmatpush1.msra.mxu0 0.0
    %1633 = vmatprep.mubr.f32.mxu0 0.0
    %v1634 = vand.u32 %v1153, 4294901760
    %1635 = vmatmul.mubr.f32.gmra.mrb[0].mxu0 %v1634
    %v1636 = vpop.f32.mrb[0].mxu0
    %v1637 = vadd.f32 %v1562, %v1636
    %v1638 = vpop.f32.mrb[0].mxu0
    %1639 = vdwg.mxu0
    %vm1640 = vcmask 58368
    %1641 = vst.msk [vmem:[#allocation2] sm:$0x3] %vm1640, %v1637
    // Predicated region
    $region22: #{tpu_custom_call.1} parent=1 // pred_check
      _
    $region23: #{tpu_custom_call.1} parent=1 // pred_check_branch
      %1643 = sbr.rel (0) target = $region25
    $region24: #{tpu_custom_call.1} parent=1 // pred_region
      %s1645 = ssub.s32 32, 32
      %1646 = vsyncadd [#allocation3], %s1645
      %s1648 = sshll.u32 [#allocation2], 4
      %s1649 = int_to_ptr.vmem [resolvable:$true] %s1648
      %1651 = dma.vmem_to_hbm [thread:$0]  %s1649, 32, %s5, [#allocation3]
    $region25: #{tpu_custom_call.1} parent=1 // pred_fallthru
      _
    // Predicated region
    $region26: #{tpu_custom_call.1} parent=1 // pred_check
      _
    $region27: #{tpu_custom_call.1} parent=1 // pred_check_branch
      %1653 = sbr.rel (0) target = $region29
    $region28: #{tpu_custom_call.1} parent=1 // pred_region
      %1654 = dma.done [#allocation3], 32
    $region29: #{tpu_custom_call.1} parent=1 // pred_fallthru
      _
    %1655 = vsyncpa [#allocation3], 1

</llo_original>
